<compile_context>
chip_gen: v6e
topology: v6e:2x2x1
jax: 0.10.0
libtpu: 0.0.40
codegen_flags: <defaults>
</compile_context>

<pallas_src>
import math
import functools

import jax
import jax.numpy as jnp
from jax import lax
from jax.experimental import pallas as pl
from jax.experimental.pallas import tpu as pltpu


def _pick_tile(dim, candidates):
    """Largest candidate that evenly divides dim, else the full dim."""
    for c in candidates:
        if dim % c == 0:
            return c
    return dim


# ---------------- kernel 1: tiled QKV projection ----------------

def _qkv_matmul_kernel(x_ref, w_ref, o_ref, acc_ref):
    # x: [tm, tk], w (torch layout, rows = out features): [tn, tk] -> o: [tm, tn]
    @pl.when(pl.program_id(2) == 0)
    def _():
        acc_ref[...] = jnp.zeros_like(acc_ref)

    acc_ref[...] += lax.dot_general(
        x_ref[...], w_ref[...],
        dimension_numbers=(((1,), (1,)), ((), ())),   # contract both last dims
        preferred_element_type=jnp.float32)

    @pl.when(pl.program_id(2) == pl.num_programs(2) - 1)
    def _():
        o_ref[...] = acc_ref[...].astype(o_ref.dtype)


# ---------------- kernel 2: fused attention + output projection ----------------

def _attn_fc_kernel(q_ref, k_ref, v_ref, wfc_ref, bfc_ref, o_ref, *, inv_scale):
    # q_ref: [1, tq, 1, H, dh], k_ref / v_ref: [1, S, 1, H, dh]
    # wfc_ref: [D, D] (torch layout), bfc_ref: [1, D], o_ref: [1, tq, D]
    _, tq, _, num_heads, dh = q_ref.shape
    S = k_ref.shape[1]
    D = o_ref.shape[-1]

    q = q_ref[...].reshape(tq, num_heads, dh)
    k = k_ref[...].reshape(S, num_heads, dh)
    v = v_ref[...].reshape(S, num_heads, dh)
    wfc = wfc_ref[...]

    if inv_scale != 1.0:                     # fold softmax scale into q
        q = q * jnp.asarray(inv_scale, dtype=q.dtype)

    acc = jnp.zeros((tq, D), dtype=jnp.float32)
    for h in range(num_heads):               # static unroll over heads
        qh = q[:, h, :]                       # [tq, dh]
        kh = k[:, h, :]                       # [S, dh]
        vh = v[:, h, :]                       # [S, dh]
        # scores: contract dh with dh directly (no k.T materialization)
        s = lax.dot_general(qh, kh,
                            dimension_numbers=(((1,), (1,)), ((), ())),
                            preferred_element_type=jnp.float32)      # [tq, S]
        s = s - jnp.max(s, axis=-1, keepdims=True)
        p = jnp.exp(s)
        denom = jnp.sum(p, axis=-1, keepdims=True)
        p = p * pl.reciprocal(denom, approx=True)
        # TODO(synk): dropout (p=0.1) on the attention probs is identity (eval).
        ctx = jnp.dot(p.astype(vh.dtype), vh,
                      preferred_element_type=jnp.float32)             # [tq, dh]
        # fused output projection: out[q, o] += ctx[q, d] * w_fc[o, h*dh + d]
        wh = wfc[:, h * dh:(h + 1) * dh]                              # [D, dh]
        acc = acc + lax.dot_general(
            ctx.astype(wh.dtype), wh,
            dimension_numbers=(((1,), (1,)), ((), ())),
            preferred_element_type=jnp.float32)                       # [tq, D]

    o_ref[0] = (acc + bfc_ref[...].astype(jnp.float32)).astype(o_ref.dtype)


# ---------------- wrapper ----------------

@functools.partial(jax.jit, static_argnames=("n_head", "scale"))
def multi_head_attn_forward(x, mask, w_qkv, w_fc, b_fc, n_head, scale=False):
    S, B, D = x.shape            # S = max_len, B = batch (per torch forward)
    H = n_head
    dh = D // H
    del mask                     # unused by the reference forward
    scale_val = float(math.sqrt(dh)) if scale else 1.0

    # ---- QKV projection: tiled, K-accumulated matmul on the MXU ----
    M, N, K = S * B, 3 * D, D
    x2 = x.reshape(M, K)
    tm = _pick_tile(M, (256, 128, 64, 32, 16, 8))
    tn = _pick_tile(N, (512, 384, 256, 128))
    tk = _pick_tile(K, (512, 256, 128))

    qkv = pl.pallas_call(
        _qkv_matmul_kernel,
        out_shape=jax.ShapeDtypeStruct((M, N), x.dtype),
        grid_spec=pltpu.PrefetchScalarGridSpec(
            num_scalar_prefetch=0,
            grid=(M // tm, N // tn, K // tk),
            in_specs=[pl.BlockSpec((tm, tk), lambda i, j, k: (i, k)),
                      pl.BlockSpec((tn, tk), lambda i, j, k: (j, k))],
            out_specs=pl.BlockSpec((tm, tn), lambda i, j, k: (i, j)),
            scratch_shapes=[pltpu.VMEM((tm, tn), jnp.float32)]),
        compiler_params=pltpu.CompilerParams(
            dimension_semantics=("parallel", "parallel", "arbitrary"),
            vmem_limit_bytes=64 * 1024 * 1024),
    )(x2, w_qkv)                 # w_qkv stays in its native [3D, D] layout

    # torch .view() re-binning: [S*B, 3D] -> [B, S, 3, H, dh].  This is a pure
    # row-major reshape (zero data movement), matching the torch semantics.
    qkv5 = qkv.reshape(B, S, 3, H, dh)

    # ---- fused attention + output projection ----
    tq = _pick_tile(S, (512, 256, 128, 64, 32, 16, 8))

    out = pl.pallas_call(
        functools.partial(_attn_fc_kernel, inv_scale=1.0 / scale_val),
        out_shape=jax.ShapeDtypeStruct((B, S, D), x.dtype),
        grid_spec=pltpu.PrefetchScalarGridSpec(
            num_scalar_prefetch=0,
            grid=(B, S // tq),
            in_specs=[
                # q / k / v are chunk-slices of the same qkv buffer, selected
                # purely via BlockSpec index maps (no wrapper chunk/transpose).
                pl.BlockSpec((1, tq, 1, H, dh), lambda b, qi: (b, qi, 0, 0, 0)),
                pl.BlockSpec((1, S, 1, H, dh), lambda b, qi: (b, 0, 1, 0, 0)),
                pl.BlockSpec((1, S, 1, H, dh), lambda b, qi: (b, 0, 2, 0, 0)),
                pl.BlockSpec((D, D), lambda b, qi: (0, 0)),
                pl.BlockSpec((1, D), lambda b, qi: (0, 0)),
            ],
            out_specs=pl.BlockSpec((1, tq, D), lambda b, qi: (b, qi, 0)),
        ),
        compiler_params=pltpu.CompilerParams(
            dimension_semantics=("parallel", "parallel"),
            vmem_limit_bytes=64 * 1024 * 1024),
    )(qkv5, qkv5, qkv5, w_fc, b_fc.reshape(1, D))
    # TODO(synk): for very long sequences, convert the kernel body to
    # flash-style KV-tiled online softmax (KV grid axis + m/l/acc scratch) to
    # bound VMEM on v7x's 64 MiB budget.
    return out


# ---------------- pure-JAX reference (for correctness check) ----------------

def reference_forward(x, w_qkv, w_fc, b_fc, n_head, scale=False):
    S, B, D = x.shape
    H, dh = n_head, D // n_head
    sc = math.sqrt(dh) if scale else 1.0
    qkv = x @ w_qkv.T
    q = qkv[..., :D].reshape(B, S, H, dh).transpose(0, 2, 1, 3)
    k = qkv[..., D:2 * D].reshape(B, S, H, dh).transpose(0, 2, 3, 1)
    v = qkv[..., 2 * D:].reshape(B, S, H, dh).transpose(0, 2, 1, 3)
    attn = jnp.einsum('bhqd,bhdk->bhqk', q, k) / sc
    attn = jax.nn.softmax(attn, axis=-1)
    o = jnp.einsum('bhqk,bhkd->bhqd', attn, v)
    o = o.transpose(0, 2, 1, 3).reshape(B, S, D)
    return o @ w_fc.T + b_fc


if __name__ == "__main__":
    key = jax.random.PRNGKey(0)
    S, B, D, H = 8, 2, 32, 4           # max_len, batch, d_model, n_head
    k1, k2, k3, k4 = jax.random.split(key, 4)

    x = jax.random.normal(k1, (S, B, D), dtype=jnp.float32)
    mask = jnp.ones((B, S), dtype=jnp.float32)          # unused by the forward

    # Deterministic parameters (shapes from __init__):
    w_qkv = jax.random.normal(k2, (3 * D, D), dtype=jnp.float32) / math.sqrt(D)
    w_fc = jax.random.normal(k3, (D, D), dtype=jnp.float32) / math.sqrt(D)
    b_fc = jax.random.normal(k4, (D,), dtype=jnp.float32) * 0.01

    for use_scale in (False, True):
        out = multi_head_attn_forward(x, mask, w_qkv, w_fc, b_fc,
                                      n_head=H, scale=use_scale)
        out = jax.block_until_ready(out)
        ref = reference_forward(x, w_qkv, w_fc, b_fc, n_head=H, scale=use_scale)
        assert out.shape == (B, S, D), out.shape
        # approx-reciprocal softmax denom -> slightly looser tolerance vs f32 ref
        assert jnp.allclose(out, ref, atol=5e-3, rtol=5e-3), \
            f"mismatch vs pure-JAX reference (scale={use_scale})"
    print("KERNEL_OK")
</pallas_src>

<mosaic_0001>
module attributes {stable_mosaic.version = 11 : i64} {
  func.func @_qkv_matmul_kernel(%arg0: i32, %arg1: i32, %arg2: i32, %arg3: memref<16x32xf32, #tpu.memory_space<vmem>>, %arg4: memref<96x32xf32, #tpu.memory_space<vmem>>, %arg5: memref<16x96xf32, #tpu.memory_space<vmem>>, %arg6: memref<16x96xf32, #tpu.memory_space<vmem>>) attributes {dimension_semantics = [#tpu.dimension_semantics<parallel>, #tpu.dimension_semantics<parallel>, #tpu.dimension_semantics<arbitrary>], iteration_bounds = array<i64: 1, 1, 1>, scalar_prefetch = 0 : i64, scratch_operands = 1 : i64, tpu.core_type = #tpu.core_type<tc>, window_params = [{transform_indices = @transform_0, window_bounds = array<i64: 16, 32>}, {transform_indices = @transform_1, window_bounds = array<i64: 96, 32>}, {transform_indices = @transform_2, window_bounds = array<i64: 16, 96>}]} {
    %c0_i32 = arith.constant 0 : i32
    %0 = arith.cmpi eq, %arg2, %c0_i32 : i32
    %1 = arith.extui %0 : i1 to i32
    %c0_i32_0 = arith.constant 0 : i32
    %2 = arith.cmpi ne, %1, %c0_i32_0 : i32
    scf.if %2 {
      %cst_10 = arith.constant 0.000000e+00 : f32
      %12 = vector.broadcast %cst_10 : f32 to vector<16x96xf32>
      %c0_11 = arith.constant 0 : index
      %c0_12 = arith.constant 0 : index
      %13 = vector.load %arg6[%c0_11, %c0_12] : memref<16x96xf32, #tpu.memory_space<vmem>>, vector<16x96xf32>
      tpu.vector_store %arg6[%c0_11, %c0_12], %12 {strides = array<i32>} : memref<16x96xf32, #tpu.memory_space<vmem>>, vector<16x96xf32>,
    } else {
    }
    %c0 = arith.constant 0 : index
    %c0_1 = arith.constant 0 : index
    %3 = vector.load %arg6[%c0, %c0_1] : memref<16x96xf32, #tpu.memory_space<vmem>>, vector<16x96xf32>
    %c0_2 = arith.constant 0 : index
    %c0_3 = arith.constant 0 : index
    %4 = vector.load %arg3[%c0_2, %c0_3] : memref<16x32xf32, #tpu.memory_space<vmem>>, vector<16x32xf32>
    %c0_4 = arith.constant 0 : index
    %c0_5 = arith.constant 0 : index
    %5 = vector.load %arg4[%c0_4, %c0_5] : memref<96x32xf32, #tpu.memory_space<vmem>>, vector<96x32xf32>
    %cst = arith.constant dense<0.000000e+00> : vector<16x96xf32>
    %6 = tpu.matmul %4, %5, %cst {dimension_numbers = #tpu.dot_dimension_numbers<[1], [1], [0], [0], [0, 0, 1, 0], [], []>} : vector<16x32xf32>, vector<96x32xf32>, vector<16x96xf32> -> vector<16x96xf32>
    %7 = arith.addf %3, %6 : vector<16x96xf32>
    %c0_6 = arith.constant 0 : index
    %c0_7 = arith.constant 0 : index
    %8 = vector.load %arg6[%c0_6, %c0_7] : memref<16x96xf32, #tpu.memory_space<vmem>>, vector<16x96xf32>
    tpu.vector_store %arg6[%c0_6, %c0_7], %7 {strides = array<i32>} : memref<16x96xf32, #tpu.memory_space<vmem>>, vector<16x96xf32>,
    %c0_i32_8 = arith.constant 0 : i32
    %9 = arith.cmpi eq, %arg2, %c0_i32_8 : i32
    %10 = arith.extui %9 : i1 to i32
    %c0_i32_9 = arith.constant 0 : i32
    %11 = arith.cmpi ne, %10, %c0_i32_9 : i32
    scf.if %11 {
      %c0_10 = arith.constant 0 : index
      %c0_11 = arith.constant 0 : index
      %12 = vector.load %arg6[%c0_10, %c0_11] : memref<16x96xf32, #tpu.memory_space<vmem>>, vector<16x96xf32>
      %c0_12 = arith.constant 0 : index
      %c0_13 = arith.constant 0 : index
      %13 = vector.load %arg5[%c0_12, %c0_13] : memref<16x96xf32, #tpu.memory_space<vmem>>, vector<16x96xf32>
      tpu.vector_store %arg5[%c0_12, %c0_13], %12 {strides = array<i32>} : memref<16x96xf32, #tpu.memory_space<vmem>>, vector<16x96xf32>,
    } else {
    }
    return
  }
  func.func @transform_0(%arg0: i32, %arg1: i32, %arg2: i32) -> (i32, i32) {
    %c0_i32 = arith.constant 0 : i32
    return %arg0, %arg2 : i32, i32
  }
  func.func @transform_1(%arg0: i32, %arg1: i32, %arg2: i32) -> (i32, i32) {
    %c0_i32 = arith.constant 0 : i32
    return %arg1, %arg2 : i32, i32
  }
  func.func @transform_2(%arg0: i32, %arg1: i32, %arg2: i32) -> (i32, i32) {
    %c0_i32 = arith.constant 0 : i32
    return %arg0, %arg1 : i32, i32
  }
}

module attributes {stable_mosaic.version = 11 : i64} {
  func.func @_attn_fc_kernel(%arg0: i32, %arg1: i32, %arg2: memref<1x8x1x4x8xf32, #tpu.memory_space<vmem>>, %arg3: memref<1x8x1x4x8xf32, #tpu.memory_space<vmem>>, %arg4: memref<1x8x1x4x8xf32, #tpu.memory_space<vmem>>, %arg5: memref<32x32xf32, #tpu.memory_space<vmem>>, %arg6: memref<1x32xf32, #tpu.memory_space<vmem>>, %arg7: memref<1x8x32xf32, #tpu.memory_space<vmem>>) attributes {dimension_semantics = [#tpu.dimension_semantics<parallel>, #tpu.dimension_semantics<parallel>], iteration_bounds = array<i64: 2, 1>, scalar_prefetch = 0 : i64, scratch_operands = 0 : i64, tpu.core_type = #tpu.core_type<tc>, window_params = [{transform_indices = @transform_0, window_bounds = array<i64: 1, 8, 1, 4, 8>}, {transform_indices = @transform_1, window_bounds = array<i64: 1, 8, 1, 4, 8>}, {transform_indices = @transform_2, window_bounds = array<i64: 1, 8, 1, 4, 8>}, {pipeline_mode = #tpu.pipeline_mode<synchronous>, transform_indices = @transform_3, window_bounds = array<i64: 32, 32>}, {pipeline_mode = #tpu.pipeline_mode<synchronous>, transform_indices = @transform_4, window_bounds = array<i64: 1, 32>}, {transform_indices = @transform_5, window_bounds = array<i64: 1, 8, 32>}]} {
    %c0 = arith.constant 0 : index
    %c0_0 = arith.constant 0 : index
    %c0_1 = arith.constant 0 : index
    %c0_2 = arith.constant 0 : index
    %c0_3 = arith.constant 0 : index
    %0 = vector.load %arg2[%c0, %c0_0, %c0_1, %c0_2, %c0_3] : memref<1x8x1x4x8xf32, #tpu.memory_space<vmem>>, vector<1x8x1x4x8xf32>
    %1 = vector.shape_cast %0 : vector<1x8x1x4x8xf32> to vector<8x4x8xf32>
    %c0_4 = arith.constant 0 : index
    %c0_5 = arith.constant 0 : index
    %c0_6 = arith.constant 0 : index
    %c0_7 = arith.constant 0 : index
    %c0_8 = arith.constant 0 : index
    %2 = vector.load %arg3[%c0_4, %c0_5, %c0_6, %c0_7, %c0_8] : memref<1x8x1x4x8xf32, #tpu.memory_space<vmem>>, vector<1x8x1x4x8xf32>
    %3 = vector.shape_cast %2 : vector<1x8x1x4x8xf32> to vector<8x4x8xf32>
    %c0_9 = arith.constant 0 : index
    %c0_10 = arith.constant 0 : index
    %c0_11 = arith.constant 0 : index
    %c0_12 = arith.constant 0 : index
    %c0_13 = arith.constant 0 : index
    %4 = vector.load %arg4[%c0_9, %c0_10, %c0_11, %c0_12, %c0_13] : memref<1x8x1x4x8xf32, #tpu.memory_space<vmem>>, vector<1x8x1x4x8xf32>
    %5 = vector.shape_cast %4 : vector<1x8x1x4x8xf32> to vector<8x4x8xf32>
    %c0_14 = arith.constant 0 : index
    %c0_15 = arith.constant 0 : index
    %6 = vector.load %arg5[%c0_14, %c0_15] : memref<32x32xf32, #tpu.memory_space<vmem>>, vector<32x32xf32>
    %cst = arith.constant 0.000000e+00 : f32
    %7 = vector.broadcast %cst : f32 to vector<8x32xf32>
    %8 = vector.extract_strided_slice %1 {offsets = [0, 0, 0], sizes = [8, 1, 8], strides = [1, 1, 1]} : vector<8x4x8xf32> to vector<8x1x8xf32>
    %9 = vector.shape_cast %8 : vector<8x1x8xf32> to vector<8x8xf32>
    %10 = vector.extract_strided_slice %3 {offsets = [0, 0, 0], sizes = [8, 1, 8], strides = [1, 1, 1]} : vector<8x4x8xf32> to vector<8x1x8xf32>
    %11 = vector.shape_cast %10 : vector<8x1x8xf32> to vector<8x8xf32>
    %12 = vector.extract_strided_slice %5 {offsets = [0, 0, 0], sizes = [8, 1, 8], strides = [1, 1, 1]} : vector<8x4x8xf32> to vector<8x1x8xf32>
    %13 = vector.shape_cast %12 : vector<8x1x8xf32> to vector<8x8xf32>
    %cst_16 = arith.constant dense<0.000000e+00> : vector<8x8xf32>
    %14 = tpu.matmul %9, %11, %cst_16 {dimension_numbers = #tpu.dot_dimension_numbers<[1], [1], [0], [0], [0, 0, 1, 0], [], []>} : vector<8x8xf32>, vector<8x8xf32>, vector<8x8xf32> -> vector<8x8xf32>
    %cst_17 = arith.constant dense<0xFF800000> : vector<8xf32>
    %15 = vector.multi_reduction <maximumf>, %14, %cst_17 [1] : vector<8x8xf32> to vector<8xf32>
    %16 = vector.shape_cast %15 : vector<8xf32> to vector<8x1xf32>
    %17 = vector.broadcast %16 : vector<8x1xf32> to vector<8x8xf32>
    %18 = arith.subf %14, %17 : vector<8x8xf32>
    %19 = math.exp %18 : vector<8x8xf32>
    %cst_18 = arith.constant dense<0.000000e+00> : vector<8xf32>
    %20 = vector.multi_reduction <add>, %19, %cst_18 [1] : vector<8x8xf32> to vector<8xf32>
    %21 = vector.shape_cast %20 : vector<8xf32> to vector<8x1xf32>
    %22 = tpu.reciprocal %21 {approx = true} : vector<8x1xf32> -> vector<8x1xf32>
    %23 = vector.broadcast %22 : vector<8x1xf32> to vector<8x8xf32>
    %24 = arith.mulf %19, %23 : vector<8x8xf32>
    %cst_19 = arith.constant dense<0.000000e+00> : vector<8x8xf32>
    %25 = tpu.matmul %24, %13, %cst_19 {dimension_numbers = #tpu.dot_dimension_numbers<[1], [0], [0], [1], [0, 0, 1, 1], [], []>} : vector<8x8xf32>, vector<8x8xf32>, vector<8x8xf32> -> vector<8x8xf32>
    %26 = vector.extract_strided_slice %6 {offsets = [0, 0], sizes = [32, 8], strides = [1, 1]} : vector<32x32xf32> to vector<32x8xf32>
    %cst_20 = arith.constant dense<0.000000e+00> : vector<8x32xf32>
    %27 = tpu.matmul %25, %26, %cst_20 {dimension_numbers = #tpu.dot_dimension_numbers<[1], [1], [0], [0], [0, 0, 1, 0], [], []>} : vector<8x8xf32>, vector<32x8xf32>, vector<8x32xf32> -> vector<8x32xf32>
    %28 = arith.addf %7, %27 : vector<8x32xf32>
    %29 = vector.extract_strided_slice %1 {offsets = [0, 1, 0], sizes = [8, 1, 8], strides = [1, 1, 1]} : vector<8x4x8xf32> to vector<8x1x8xf32>
    %30 = vector.shape_cast %29 : vector<8x1x8xf32> to vector<8x8xf32>
    %31 = vector.extract_strided_slice %3 {offsets = [0, 1, 0], sizes = [8, 1, 8], strides = [1, 1, 1]} : vector<8x4x8xf32> to vector<8x1x8xf32>
    %32 = vector.shape_cast %31 : vector<8x1x8xf32> to vector<8x8xf32>
    %33 = vector.extract_strided_slice %5 {offsets = [0, 1, 0], sizes = [8, 1, 8], strides = [1, 1, 1]} : vector<8x4x8xf32> to vector<8x1x8xf32>
    %34 = vector.shape_cast %33 : vector<8x1x8xf32> to vector<8x8xf32>
    %cst_21 = arith.constant dense<0.000000e+00> : vector<8x8xf32>
    %35 = tpu.matmul %30, %32, %cst_21 {dimension_numbers = #tpu.dot_dimension_numbers<[1], [1], [0], [0], [0, 0, 1, 0], [], []>} : vector<8x8xf32>, vector<8x8xf32>, vector<8x8xf32> -> vector<8x8xf32>
    %cst_22 = arith.constant dense<0xFF800000> : vector<8xf32>
    %36 = vector.multi_reduction <maximumf>, %35, %cst_22 [1] : vector<8x8xf32> to vector<8xf32>
    %37 = vector.shape_cast %36 : vector<8xf32> to vector<8x1xf32>
    %38 = vector.broadcast %37 : vector<8x1xf32> to vector<8x8xf32>
    %39 = arith.subf %35, %38 : vector<8x8xf32>
    %40 = math.exp %39 : vector<8x8xf32>
    %cst_23 = arith.constant dense<0.000000e+00> : vector<8xf32>
    %41 = vector.multi_reduction <add>, %40, %cst_23 [1] : vector<8x8xf32> to vector<8xf32>
    %42 = vector.shape_cast %41 : vector<8xf32> to vector<8x1xf32>
    %43 = tpu.reciprocal %42 {approx = true} : vector<8x1xf32> -> vector<8x1xf32>
    %44 = vector.broadcast %43 : vector<8x1xf32> to vector<8x8xf32>
    %45 = arith.mulf %40, %44 : vector<8x8xf32>
    %cst_24 = arith.constant dense<0.000000e+00> : vector<8x8xf32>
    %46 = tpu.matmul %45, %34, %cst_24 {dimension_numbers = #tpu.dot_dimension_numbers<[1], [0], [0], [1], [0, 0, 1, 1], [], []>} : vector<8x8xf32>, vector<8x8xf32>, vector<8x8xf32> -> vector<8x8xf32>
    %47 = vector.extract_strided_slice %6 {offsets = [0, 8], sizes = [32, 8], strides = [1, 1]} : vector<32x32xf32> to vector<32x8xf32>
    %cst_25 = arith.constant dense<0.000000e+00> : vector<8x32xf32>
    %48 = tpu.matmul %46, %47, %cst_25 {dimension_numbers = #tpu.dot_dimension_numbers<[1], [1], [0], [0], [0, 0, 1, 0], [], []>} : vector<8x8xf32>, vector<32x8xf32>, vector<8x32xf32> -> vector<8x32xf32>
    %49 = arith.addf %28, %48 : vector<8x32xf32>
    %50 = vector.extract_strided_slice %1 {offsets = [0, 2, 0], sizes = [8, 1, 8], strides = [1, 1, 1]} : vector<8x4x8xf32> to vector<8x1x8xf32>
    %51 = vector.shape_cast %50 : vector<8x1x8xf32> to vector<8x8xf32>
    %52 = vector.extract_strided_slice %3 {offsets = [0, 2, 0], sizes = [8, 1, 8], strides = [1, 1, 1]} : vector<8x4x8xf32> to vector<8x1x8xf32>
    %53 = vector.shape_cast %52 : vector<8x1x8xf32> to vector<8x8xf32>
    %54 = vector.extract_strided_slice %5 {offsets = [0, 2, 0], sizes = [8, 1, 8], strides = [1, 1, 1]} : vector<8x4x8xf32> to vector<8x1x8xf32>
    %55 = vector.shape_cast %54 : vector<8x1x8xf32> to vector<8x8xf32>
    %cst_26 = arith.constant dense<0.000000e+00> : vector<8x8xf32>
    %56 = tpu.matmul %51, %53, %cst_26 {dimension_numbers = #tpu.dot_dimension_numbers<[1], [1], [0], [0], [0, 0, 1, 0], [], []>} : vector<8x8xf32>, vector<8x8xf32>, vector<8x8xf32> -> vector<8x8xf32>
    %cst_27 = arith.constant dense<0xFF800000> : vector<8xf32>
    %57 = vector.multi_reduction <maximumf>, %56, %cst_27 [1] : vector<8x8xf32> to vector<8xf32>
    %58 = vector.shape_cast %57 : vector<8xf32> to vector<8x1xf32>
    %59 = vector.broadcast %58 : vector<8x1xf32> to vector<8x8xf32>
    %60 = arith.subf %56, %59 : vector<8x8xf32>
    %61 = math.exp %60 : vector<8x8xf32>
    %cst_28 = arith.constant dense<0.000000e+00> : vector<8xf32>
    %62 = vector.multi_reduction <add>, %61, %cst_28 [1] : vector<8x8xf32> to vector<8xf32>
    %63 = vector.shape_cast %62 : vector<8xf32> to vector<8x1xf32>
    %64 = tpu.reciprocal %63 {approx = true} : vector<8x1xf32> -> vector<8x1xf32>
    %65 = vector.broadcast %64 : vector<8x1xf32> to vector<8x8xf32>
    %66 = arith.mulf %61, %65 : vector<8x8xf32>
    %cst_29 = arith.constant dense<0.000000e+00> : vector<8x8xf32>
    %67 = tpu.matmul %66, %55, %cst_29 {dimension_numbers = #tpu.dot_dimension_numbers<[1], [0], [0], [1], [0, 0, 1, 1], [], []>} : vector<8x8xf32>, vector<8x8xf32>, vector<8x8xf32> -> vector<8x8xf32>
    %68 = vector.extract_strided_slice %6 {offsets = [0, 16], sizes = [32, 8], strides = [1, 1]} : vector<32x32xf32> to vector<32x8xf32>
    %cst_30 = arith.constant dense<0.000000e+00> : vector<8x32xf32>
    %69 = tpu.matmul %67, %68, %cst_30 {dimension_numbers = #tpu.dot_dimension_numbers<[1], [1], [0], [0], [0, 0, 1, 0], [], []>} : vector<8x8xf32>, vector<32x8xf32>, vector<8x32xf32> -> vector<8x32xf32>
    %70 = arith.addf %49, %69 : vector<8x32xf32>
    %71 = vector.extract_strided_slice %1 {offsets = [0, 3, 0], sizes = [8, 1, 8], strides = [1, 1, 1]} : vector<8x4x8xf32> to vector<8x1x8xf32>
    %72 = vector.shape_cast %71 : vector<8x1x8xf32> to vector<8x8xf32>
    %73 = vector.extract_strided_slice %3 {offsets = [0, 3, 0], sizes = [8, 1, 8], strides = [1, 1, 1]} : vector<8x4x8xf32> to vector<8x1x8xf32>
    %74 = vector.shape_cast %73 : vector<8x1x8xf32> to vector<8x8xf32>
    %75 = vector.extract_strided_slice %5 {offsets = [0, 3, 0], sizes = [8, 1, 8], strides = [1, 1, 1]} : vector<8x4x8xf32> to vector<8x1x8xf32>
    %76 = vector.shape_cast %75 : vector<8x1x8xf32> to vector<8x8xf32>
    %cst_31 = arith.constant dense<0.000000e+00> : vector<8x8xf32>
    %77 = tpu.matmul %72, %74, %cst_31 {dimension_numbers = #tpu.dot_dimension_numbers<[1], [1], [0], [0], [0, 0, 1, 0], [], []>} : vector<8x8xf32>, vector<8x8xf32>, vector<8x8xf32> -> vector<8x8xf32>
    %cst_32 = arith.constant dense<0xFF800000> : vector<8xf32>
    %78 = vector.multi_reduction <maximumf>, %77, %cst_32 [1] : vector<8x8xf32> to vector<8xf32>
    %79 = vector.shape_cast %78 : vector<8xf32> to vector<8x1xf32>
    %80 = vector.broadcast %79 : vector<8x1xf32> to vector<8x8xf32>
    %81 = arith.subf %77, %80 : vector<8x8xf32>
    %82 = math.exp %81 : vector<8x8xf32>
    %cst_33 = arith.constant dense<0.000000e+00> : vector<8xf32>
    %83 = vector.multi_reduction <add>, %82, %cst_33 [1] : vector<8x8xf32> to vector<8xf32>
    %84 = vector.shape_cast %83 : vector<8xf32> to vector<8x1xf32>
    %85 = tpu.reciprocal %84 {approx = true} : vector<8x1xf32> -> vector<8x1xf32>
    %86 = vector.broadcast %85 : vector<8x1xf32> to vector<8x8xf32>
    %87 = arith.mulf %82, %86 : vector<8x8xf32>
    %cst_34 = arith.constant dense<0.000000e+00> : vector<8x8xf32>
    %88 = tpu.matmul %87, %76, %cst_34 {dimension_numbers = #tpu.dot_dimension_numbers<[1], [0], [0], [1], [0, 0, 1, 1], [], []>} : vector<8x8xf32>, vector<8x8xf32>, vector<8x8xf32> -> vector<8x8xf32>
    %89 = vector.extract_strided_slice %6 {offsets = [0, 24], sizes = [32, 8], strides = [1, 1]} : vector<32x32xf32> to vector<32x8xf32>
    %cst_35 = arith.constant dense<0.000000e+00> : vector<8x32xf32>
    %90 = tpu.matmul %88, %89, %cst_35 {dimension_numbers = #tpu.dot_dimension_numbers<[1], [1], [0], [0], [0, 0, 1, 0], [], []>} : vector<8x8xf32>, vector<32x8xf32>, vector<8x32xf32> -> vector<8x32xf32>
    %91 = arith.addf %70, %90 : vector<8x32xf32>
    %c0_36 = arith.constant 0 : index
    %c0_37 = arith.constant 0 : index
    %92 = vector.load %arg6[%c0_36, %c0_37] : memref<1x32xf32, #tpu.memory_space<vmem>>, vector<1x32xf32>
    %93 = vector.broadcast %92 : vector<1x32xf32> to vector<8x32xf32>
    %94 = arith.addf %91, %93 : vector<8x32xf32>
    %c0_38 = arith.constant 0 : index
    %c0_39 = arith.constant 0 : index
    %c0_40 = arith.constant 0 : index
    %95 = vector.load %arg7[%c0_38, %c0_39, %c0_40] : memref<1x8x32xf32, #tpu.memory_space<vmem>>, vector<1x8x32xf32>
    %96 = vector.shape_cast %95 : vector<1x8x32xf32> to vector<8x32xf32>
    %97 = vector.shape_cast %94 : vector<8x32xf32> to vector<1x8x32xf32>
    tpu.vector_store %arg7[%c0_38, %c0_39, %c0_40], %97 {strides = array<i32>} : memref<1x8x32xf32, #tpu.memory_space<vmem>>, vector<1x8x32xf32>,
    return
  }
  func.func @transform_0(%arg0: i32, %arg1: i32) -> (i32, i32, i32, i32, i32) {
    %c0_i32 = arith.constant 0 : i32
    %c0_i32_0 = arith.constant 0 : i32
    %c0_i32_1 = arith.constant 0 : i32
    %c0_i32_2 = arith.constant 0 : i32
    return %arg0, %arg1, %c0_i32, %c0_i32_0, %c0_i32_1 : i32, i32, i32, i32, i32
  }
  func.func @transform_1(%arg0: i32, %arg1: i32) -> (i32, i32, i32, i32, i32) {
    %c0_i32 = arith.constant 0 : i32
    %c1_i32 = arith.constant 1 : i32
    %c0_i32_0 = arith.constant 0 : i32
    %c0_i32_1 = arith.constant 0 : i32
    %c0_i32_2 = arith.constant 0 : i32
    return %arg0, %c0_i32, %c1_i32, %c0_i32_0, %c0_i32_1 : i32, i32, i32, i32, i32
  }
  func.func @transform_2(%arg0: i32, %arg1: i32) -> (i32, i32, i32, i32, i32) {
    %c0_i32 = arith.constant 0 : i32
    %c2_i32 = arith.constant 2 : i32
    %c0_i32_0 = arith.constant 0 : i32
    %c0_i32_1 = arith.constant 0 : i32
    %c0_i32_2 = arith.constant 0 : i32
    return %arg0, %c0_i32, %c2_i32, %c0_i32_0, %c0_i32_1 : i32, i32, i32, i32, i32
  }
  func.func @transform_3(%arg0: i32, %arg1: i32) -> (i32, i32) {
    %c0_i32 = arith.constant 0 : i32
    %c0_i32_0 = arith.constant 0 : i32
    %c0_i32_1 = arith.constant 0 : i32
    return %c0_i32, %c0_i32_0 : i32, i32
  }
  func.func @transform_4(%arg0: i32, %arg1: i32) -> (i32, i32) {
    %c0_i32 = arith.constant 0 : i32
    %c0_i32_0 = arith.constant 0 : i32
    %c0_i32_1 = arith.constant 0 : i32
    return %c0_i32, %c0_i32_0 : i32, i32
  }
  func.func @transform_5(%arg0: i32, %arg1: i32) -> (i32, i32, i32) {
    %c0_i32 = arith.constant 0 : i32
    %c0_i32_0 = arith.constant 0 : i32
    return %arg0, %arg1, %c0_i32 : i32, i32, i32
  }
}

</mosaic_0001>

<llo_original>
// kernel: multi_head_attn_forward.2
$region0: #{multi_head_attn_forward.2}
  #allocation0 [shape = 'u32[]', space=smem, size = 0x4, offset = 0x4, fixed_abs, tag = 'smem constant byte address 0x4 - core index']
  #allocation1 [shape = 'u32[144,128]{1,0:T(1,128)}', space=vmem, size = 0x12000, scoped, tag = 'internal scratch']
  #allocation2 [shape = 'f32[16,96]{1,0:T(8,128)}', space=vmem, size = 0x2000, scoped, tag = 'scratch operand']
  %s0 = inlined_call_operand.vmem [shape: f32[16,32], index: 0, kind: input, shape index: {}]
  %s1 = inlined_call_operand.vmem [shape: f32[96,32], index: 1, kind: input, shape index: {}]
  %s2 = inlined_call_operand.vmem [shape: f32[16,96], index: 2, kind: output, shape index: {}]
  %s3 = sld [smem:[#allocation0]]
  $region26: #{multi_head_attn_forward.2} parent=0
    _
  %s5 = ssub.s32 1, %s3
  %s6 = scalar_select 0, %s5, %s3
  // Predicated region
  $region2: #{multi_head_attn_forward.2} parent=0 // pred_check
    _
  $region3: #{multi_head_attn_forward.2} parent=0 // pred_check_branch
    %8 = sbr.rel (0) target = $region5
  $region4: #{multi_head_attn_forward.2} parent=0 // pred_region
    _
  $region5: #{multi_head_attn_forward.2} parent=0 // pred_fallthru
    _
  // Predicated region
  $region6: #{multi_head_attn_forward.2} parent=0 // pred_check
    _
  $region7: #{multi_head_attn_forward.2} parent=0 // pred_check_branch
    %10 = sbr.rel (0) target = $region9
  $region8: #{multi_head_attn_forward.2} parent=0 // pred_region
    _
  $region9: #{multi_head_attn_forward.2} parent=0 // pred_fallthru
    _
  %p11 = scmp.eq.s32.totalorder 0, 0
  // Predicated region
  $region10: #{multi_head_attn_forward.2} parent=0 // pred_check
    %p12 = pneg %p11
  $region11: #{multi_head_attn_forward.2} parent=0 // pred_check_branch
    %14 = sbr.rel (%p12) target = $region13
  $region12: #{multi_head_attn_forward.2} parent=0 // pred_region
    %vm15 = vcmask 785408
    %16 = vst.msk [vmem:[#allocation2] sm:$0xff] %vm15, 0.0
    %17 = vst.msk [vmem:[#allocation2 + $0x8] sm:$0xff] %vm15, 0.0
  $region13: #{multi_head_attn_forward.2} parent=0 // pred_fallthru
    _
  %v18 = vld [vmem:[#allocation2] sm:$0xff]
  %v19 = vld [vmem:[#allocation2 + $0x8] sm:$0xff]
  %v20 = vld [vmem:[%s0] sm:$0xff]
  %v21 = vld [vmem:[%s0 + $0x8] sm:$0xff]
  %v22 = vld [vmem:[%s1] sm:$0xff]
  %v23 = vld [vmem:[%s1 + $0x8] sm:$0xff]
  %v24 = vld [vmem:[%s1 + $0x10] sm:$0xff]
  %v25 = vld [vmem:[%s1 + $0x18] sm:$0xff]
  %v26 = vld [vmem:[%s1 + $0x20] sm:$0xff]
  %v27 = vld [vmem:[%s1 + $0x28] sm:$0xff]
  %v28 = vld [vmem:[%s1 + $0x30] sm:$0xff]
  %v29 = vld [vmem:[%s1 + $0x38] sm:$0xff]
  %v30 = vld [vmem:[%s1 + $0x40] sm:$0xff]
  %v31 = vld [vmem:[%s1 + $0x48] sm:$0xff]
  %v32 = vld [vmem:[%s1 + $0x50] sm:$0xff]
  %v33 = vld [vmem:[%s1 + $0x58] sm:$0xff]
  %vm34 = vcmask 261120
  %v36 = vsel %vm34, %v20, 0
  %v39 = vsel %vm34, %v21, 0
  %v42 = vsel %vm34, %v22, 0
  %v45 = vsel %vm34, %v23, 0
  %v48 = vsel %vm34, %v24, 0
  %v51 = vsel %vm34, %v25, 0
  %v54 = vsel %vm34, %v26, 0
  %v57 = vsel %vm34, %v27, 0
  %v60 = vsel %vm34, %v28, 0
  %v63 = vsel %vm34, %v29, 0
  %v66 = vsel %vm34, %v30, 0
  %v69 = vsel %vm34, %v31, 0
  %v72 = vsel %vm34, %v32, 0
  %v75 = vsel %vm34, %v33, 0
  %77 = vmatprep.subr.mxu0 0.0
  %78 = vmatpush1.xpose.msra.mxu0 0.0
  %79 = vmatprep.subr.mxu0 0.0
  %80 = vmatpush1.xpose.msra.mxu0 0.0
  %81 = vmatprep.subr.mxu0 0.0
  %82 = vmatpush1.xpose.msra.mxu0 0.0
  %83 = vmatprep.subr.mxu0 0.0
  %84 = vmatpush1.xpose.msra.mxu0 0.0
  %85 = vmatprep.subr.mxu0 0.0
  %86 = vmatpush1.xpose.msra.mxu0 %v75
  %87 = vmatprep.subr.mxu0 0.0
  %88 = vmatpush1.xpose.msra.mxu0 %v72
  %89 = vmatprep.subr.mxu0 0.0
  %90 = vmatpush1.xpose.msra.mxu0 %v69
  %91 = vmatprep.subr.mxu0 0.0
  %92 = vmatpush1.xpose.msra.mxu0 %v66
  %93 = vmatprep.subr.mxu0 0.0
  %94 = vmatpush1.xpose.msra.mxu0 %v63
  %95 = vmatprep.subr.mxu0 0.0
  %96 = vmatpush1.xpose.msra.mxu0 %v60
  %97 = vmatprep.subr.mxu0 0.0
  %98 = vmatpush1.xpose.msra.mxu0 %v57
  %99 = vmatprep.subr.mxu0 0.0
  %100 = vmatpush1.xpose.msra.mxu0 %v54
  %101 = vmatprep.subr.mxu0 0.0
  %102 = vmatpush1.xpose.msra.mxu0 %v51
  %103 = vmatprep.subr.mxu0 0.0
  %104 = vmatpush1.xpose.msra.mxu0 %v48
  %105 = vmatprep.subr.mxu0 0.0
  %106 = vmatpush1.xpose.msra.mxu0 %v45
  %107 = vmatprep.subr.mxu0 0.0
  %108 = vmatpush1.xpose.msra.mxu0 %v42
  %109 = vmatprep.subr.mxu0 0.0
  %110 = vmatpush2.xpose.msra.mxu0 0.0
  %111 = vmatprep.subr.mxu0 0.0
  %112 = vmatpush2.xpose.msra.mxu0 0.0
  %113 = vmatprep.subr.mxu0 0.0
  %114 = vmatpush2.xpose.msra.mxu0 0.0
  %115 = vmatprep.subr.mxu0 0.0
  %116 = vmatpush2.xpose.msra.mxu0 0.0
  %117 = vmatprep.subr.mxu0 0.0
  %118 = vmatpush2.xpose.msra.mxu0 0.0
  %119 = vmatprep.subr.mxu0 0.0
  %120 = vmatpush2.xpose.msra.mxu0 0.0
  %121 = vmatprep.subr.mxu0 0.0
  %122 = vmatpush2.xpose.msra.mxu0 0.0
  %123 = vmatprep.subr.mxu0 0.0
  %124 = vmatpush2.xpose.msra.mxu0 0.0
  %125 = vmatprep.subr.mxu0 0.0
  %126 = vmatpush2.xpose.msra.mxu0 0.0
  %127 = vmatprep.subr.mxu0 0.0
  %128 = vmatpush2.xpose.msra.mxu0 0.0
  %129 = vmatprep.subr.mxu0 0.0
  %130 = vmatpush2.xpose.msra.mxu0 0.0
  %131 = vmatprep.subr.mxu0 0.0
  %132 = vmatpush2.xpose.msra.mxu0 0.0
  %133 = vmatprep.subr.mxu0 0.0
  %134 = vmatpush2.xpose.msra.mxu0 0.0
  %135 = vmatprep.subr.mxu0 0.0
  %136 = vmatpush2.xpose.msra.mxu0 0.0
  %137 = vmatprep.subr.mxu0 0.0
  %138 = vmatpush2.xpose.msra.mxu0 0.0
  %139 = vmatprep.subr.mxu0 0.0
  %140 = vmatpush2.xpose.msra.mxu0 0.0
  %141 = vmatprep.mubr.f32.mxu0 0.0
  %142 = vmatmul.mubr.f32.gmra.mxu0 %v36
  %v143 = vpop.f32.mrf.mxu0
  %v144 = vadd.f32 0.0, %v143
  %v145 = vpop.f32.mrf.mxu0
  %146 = vmatprep.mubr.f32.mxu0 0.0
  %147 = vmatmul.mubr.f32.gmra.mxu0 %v39
  %v148 = vpop.f32.mrf.mxu0
  %v149 = vadd.f32 0.0, %v148
  %v150 = vpop.f32.mrf.mxu0
  %151 = vdwg.mxu0
  %v152 = vadd.f32 %v18, %v144
  %v153 = vadd.f32 %v19, %v149
  %vm154 = vcmask 785408
  %155 = vst.msk [vmem:[#allocation2] sm:$0xff] %vm154, %v152
  %156 = vst.msk [vmem:[#allocation2 + $0x8] sm:$0xff] %vm154, %v153
  // Predicated region
  $region14: #{multi_head_attn_forward.2} parent=0 // pred_check
    %p157 = pneg %p11
  $region15: #{multi_head_attn_forward.2} parent=0 // pred_check_branch
    %159 = sbr.rel (%p157) target = $region17
  $region16: #{multi_head_attn_forward.2} parent=0 // pred_region
    %v160 = vld [vmem:[#allocation2] sm:$0xff]
    %v161 = vld [vmem:[#allocation2 + $0x8] sm:$0xff]
    %162 = vst.msk [vmem:[%s2] sm:$0xff] %vm154, %v160
    %163 = vst.msk [vmem:[%s2 + $0x8] sm:$0xff] %vm154, %v161
  $region17: #{multi_head_attn_forward.2} parent=0 // pred_fallthru
    _
  // Predicated region
  $region18: #{multi_head_attn_forward.2} parent=0 // pred_check
    _
  $region19: #{multi_head_attn_forward.2} parent=0 // pred_check_branch
    %165 = sbr.rel (0) target = $region21
  $region20: #{multi_head_attn_forward.2} parent=0 // pred_region
    _
  $region21: #{multi_head_attn_forward.2} parent=0 // pred_fallthru
    _
  // Predicated region
  $region22: #{multi_head_attn_forward.2} parent=0 // pred_check
    _
  $region23: #{multi_head_attn_forward.2} parent=0 // pred_check_branch
    %167 = sbr.rel (0) target = $region25
  $region24: #{multi_head_attn_forward.2} parent=0 // pred_region
    _
  $region25: #{multi_head_attn_forward.2} parent=0 // pred_fallthru
    _

// kernel: multi_head_attn_forward.3
$region0: #{multi_head_attn_forward.3}
  #allocation0 [shape = 'u32[]', space=smem, size = 0x4, offset = 0x4, fixed_abs, tag = 'smem constant byte address 0x4 - core index']
  #allocation1 [shape = 'u32[144,128]{1,0:T(1,128)}', space=vmem, size = 0x12000, scoped, tag = 'internal scratch']
  %s0 = inlined_call_operand.vmem [shape: f32[2,8,3,4,8], index: 0, kind: input, shape index: {}, may-alias: {0,1,2}]
  %s1 = inlined_call_operand.vmem [shape: f32[2,8,3,4,8], index: 1, kind: input, shape index: {}, may-alias: {0,1,2}]
  %s2 = inlined_call_operand.vmem [shape: f32[2,8,3,4,8], index: 2, kind: input, shape index: {}, may-alias: {0,1,2}]
  %s3 = inlined_call_operand.vmem [shape: f32[32,32], index: 3, kind: input, shape index: {}]
  %s4 = inlined_call_operand.vmem [shape: f32[1,32], index: 4, kind: input, shape index: {}]
  %s5 = inlined_call_operand.hbm [shape: f32[2,8,32], index: 5, kind: output, shape index: {}]
  %s6 = sld [smem:[#allocation0]]
  $region176: #{multi_head_attn_forward.3} parent=0
    _
  %s8 = ssub.s32 1, %s6
  %s9 = scalar_select 0, %s8, %s6
  $region1: #{multi_head_attn_forward.3} parent=0
    #allocation2 [shape = 'u8[32768]{0}', space=vmem, size = 0x8000, scoped, tag = 'input window, operand 0']
    #allocation3 [shape = 'u8[32768]{0}', space=vmem, size = 0x8000, scoped, tag = 'input window, operand 1']
    #allocation4 [shape = 'u8[32768]{0}', space=vmem, size = 0x8000, scoped, tag = 'input window, operand 2']
    #allocation5 [shape = 'u8[8192]{0}', space=vmem, size = 0x2000, scoped, tag = 'output window, operand 0']
    #allocation6 [shape = 's32[2]{0}', space=sflag, size = 0x8, scoped, tag = 'scoped memory for multi_head_attn_forward.3']
    %10 = vsyncpa [#allocation6], 0
    %s11 = scalar_lea.sflag [#allocation6], 1
    %12 = vsyncpa %s11, 0
    loop: start=0, step=1, limit=4
    $region2: #{multi_head_attn_forward.3} parent=1 // loop_pre_header
      _
    $region3: #{multi_head_attn_forward.3} parent=1 // loop_header
      %s14 = sphi 0, %s18
      %p15 = scmp.ge.s32.totalorder %s14, 4
      %s21 = sphi 0, %s33
      %s22 = sphi 0, %s29
      %s23 = sphi 0, %s21
      %s24 = sphi 0, %s22
      %s25 = sphi 0, %s23
      %s26 = sphi 0, %s24
      %s38 = sphi 0, %s40
      %s41 = sphi 0, %s38
      %s42 = sphi 0, %s41
      %s58 = sphi 0, %s42
      %s64 = sphi 0, %s66
      %s67 = sphi 0, %s64
      %s68 = sphi 0, %s67
      %s84 = sphi 0, %s68
      %s90 = sphi 0, %s92
      %s93 = sphi 0, %s90
      %s94 = sphi 0, %s93
      %s110 = sphi 0, %s94
      %s114 = sphi 0, %s114
      %s116 = sphi 0, %s114
      %s117 = sphi 0, %s116
      %s131 = sphi 0, %s117
      %s135 = sphi 0, %s135
      %s137 = sphi 0, %s135
      %s138 = sphi 0, %s137
      %s152 = sphi 0, %s138
      %s160 = sphi 0, %s162
      %s163 = sphi 0, %s160
      %s164 = sphi 0, %s163
      %s180 = sphi 0, %s164
    $region4: #{multi_head_attn_forward.3} parent=1 // loop_header_branch
      %17 = sbr.rel (%p15) target = $region8
    $region5: #{multi_head_attn_forward.3} parent=1 // loop_body
      %s19 = ssub.s32 %s14, 1
      %s20 = ssub.s32 %s14, 2
      %s27 = sadd.s32 1, %s22
      %p28 = scmp.ge.s32.totalorder %s27, 1
      %s29 = scalar_select %p28, 0, %s27
      %s30 = sadd.s32 1, %s21
      %s31 = scalar_select %p28, %s30, %s21
      %p32 = scmp.ge.s32.totalorder %s31, 2
      %s33 = scalar_select %p32, 0, %s31
      %s34 = ssub.s32 %s21, %s33
      %s35 = ssub.s32 %s22, %s29
      %s36 = sor.u32 %s34, %s35
      %p37 = scmp.eq.s32.totalorder %s36, 0
      %s39 = sadd.s32 %s38, 1
      %s40 = scalar_select %p37, %s38, %s39
      %p43 = pneg %p37
      %p44 = scmp.eq.s32.totalorder %s14, 1
      %p45 = por %p43, %p44
      %p46 = scmp.ne.s32.totalorder %s38, %s41
      %p47 = scmp.eq.s32.totalorder %s14, 0
      %p48 = por %p46, %p47
      %p49 = scmp.ne.s32.totalorder %s38, %s41
      %p50 = scmp.eq.s32.totalorder %s19, 1
      %p51 = por %p49, %p50
      %p52 = scmp.ne.s32.totalorder %s41, %s42
      %p53 = scmp.eq.s32.totalorder %s19, 0
      %p54 = por %p52, %p53
      %p55 = scmp.ne.s32.totalorder %s41, %s42
      %p56 = scmp.eq.s32.totalorder %s20, 1
      %p57 = por %p55, %p56
      %p59 = scmp.ne.s32.totalorder %s42, %s58
      %p60 = scmp.eq.s32.totalorder %s20, 0
      %p61 = por %p59, %p60
      %s62 = ssub.s32 %s21, %s33
      %p63 = scmp.eq.s32.totalorder %s62, 0
      %s65 = sadd.s32 %s64, 1
      %s66 = scalar_select %p63, %s64, %s65
      %p69 = pneg %p63
      %p70 = scmp.eq.s32.totalorder %s14, 1
      %p71 = por %p69, %p70
      %p72 = scmp.ne.s32.totalorder %s64, %s67
      %p73 = scmp.eq.s32.totalorder %s14, 0
      %p74 = por %p72, %p73
      %p75 = scmp.ne.s32.totalorder %s64, %s67
      %p76 = scmp.eq.s32.totalorder %s19, 1
      %p77 = por %p75, %p76
      %p78 = scmp.ne.s32.totalorder %s67, %s68
      %p79 = scmp.eq.s32.totalorder %s19, 0
      %p80 = por %p78, %p79
      %p81 = scmp.ne.s32.totalorder %s67, %s68
      %p82 = scmp.eq.s32.totalorder %s20, 1
      %p83 = por %p81, %p82
      %p85 = scmp.ne.s32.totalorder %s68, %s84
      %p86 = scmp.eq.s32.totalorder %s20, 0
      %p87 = por %p85, %p86
      %s88 = ssub.s32 %s21, %s33
      %p89 = scmp.eq.s32.totalorder %s88, 0
      %s91 = sadd.s32 %s90, 1
      %s92 = scalar_select %p89, %s90, %s91
      %p95 = pneg %p89
      %p96 = scmp.eq.s32.totalorder %s14, 1
      %p97 = por %p95, %p96
      %p98 = scmp.ne.s32.totalorder %s90, %s93
      %p99 = scmp.eq.s32.totalorder %s14, 0
      %p100 = por %p98, %p99
      %p101 = scmp.ne.s32.totalorder %s90, %s93
      %p102 = scmp.eq.s32.totalorder %s19, 1
      %p103 = por %p101, %p102
      %p104 = scmp.ne.s32.totalorder %s93, %s94
      %p105 = scmp.eq.s32.totalorder %s19, 0
      %p106 = por %p104, %p105
      %p107 = scmp.ne.s32.totalorder %s93, %s94
      %p108 = scmp.eq.s32.totalorder %s20, 1
      %p109 = por %p107, %p108
      %p111 = scmp.ne.s32.totalorder %s94, %s110
      %p112 = scmp.eq.s32.totalorder %s20, 0
      %p113 = por %p111, %p112
      %s115 = sadd.s32 %s114, 1
      %p118 = scmp.eq.s32.totalorder %s14, 1
      %p119 = scmp.ne.s32.totalorder %s114, %s116
      %p120 = scmp.eq.s32.totalorder %s14, 0
      %p121 = por %p119, %p120
      %p122 = scmp.ne.s32.totalorder %s114, %s116
      %p123 = scmp.eq.s32.totalorder %s19, 1
      %p124 = por %p122, %p123
      %p125 = scmp.ne.s32.totalorder %s116, %s117
      %p126 = scmp.eq.s32.totalorder %s19, 0
      %p127 = por %p125, %p126
      %p128 = scmp.ne.s32.totalorder %s116, %s117
      %p129 = scmp.eq.s32.totalorder %s20, 1
      %p130 = por %p128, %p129
      %p132 = scmp.ne.s32.totalorder %s117, %s131
      %p133 = scmp.eq.s32.totalorder %s20, 0
      %p134 = por %p132, %p133
      %s136 = sadd.s32 %s135, 1
      %p139 = scmp.eq.s32.totalorder %s14, 1
      %p140 = scmp.ne.s32.totalorder %s135, %s137
      %p141 = scmp.eq.s32.totalorder %s14, 0
      %p142 = por %p140, %p141
      %p143 = scmp.ne.s32.totalorder %s135, %s137
      %p144 = scmp.eq.s32.totalorder %s19, 1
      %p145 = por %p143, %p144
      %p146 = scmp.ne.s32.totalorder %s137, %s138
      %p147 = scmp.eq.s32.totalorder %s19, 0
      %p148 = por %p146, %p147
      %p149 = scmp.ne.s32.totalorder %s137, %s138
      %p150 = scmp.eq.s32.totalorder %s20, 1
      %p151 = por %p149, %p150
      %p153 = scmp.ne.s32.totalorder %s138, %s152
      %p154 = scmp.eq.s32.totalorder %s20, 0
      %p155 = por %p153, %p154
      %s156 = ssub.s32 %s21, %s33
      %s157 = ssub.s32 %s22, %s29
      %s158 = sor.u32 %s156, %s157
      %p159 = scmp.eq.s32.totalorder %s158, 0
      %s161 = sadd.s32 %s160, 1
      %s162 = scalar_select %p159, %s160, %s161
      %p165 = pneg %p159
      %p166 = scmp.eq.s32.totalorder %s14, 1
      %p167 = por %p165, %p166
      %p168 = scmp.ne.s32.totalorder %s160, %s163
      %p169 = scmp.eq.s32.totalorder %s14, 0
      %p170 = por %p168, %p169
      %p171 = scmp.ne.s32.totalorder %s160, %s163
      %p172 = scmp.eq.s32.totalorder %s19, 1
      %p173 = por %p171, %p172
      %p174 = scmp.ne.s32.totalorder %s163, %s164
      %p175 = scmp.eq.s32.totalorder %s19, 0
      %p176 = por %p174, %p175
      %p177 = scmp.ne.s32.totalorder %s163, %s164
      %p178 = scmp.eq.s32.totalorder %s20, 1
      %p179 = por %p177, %p178
      %p181 = scmp.ne.s32.totalorder %s164, %s180
      %p182 = scmp.eq.s32.totalorder %s20, 0
      %p183 = por %p181, %p182
      %p184 = scmp.le.s32.totalorder 1, %s14
      %p185 = scmp.lt.s32.totalorder %s14, 3
      %p186 = pnand %p184, %p185
      %p187 = pneg %p186
      // Predicated region
      $region9: #{multi_head_attn_forward.3} parent=5 // pred_check
        _
      $region10: #{multi_head_attn_forward.3} parent=5 // pred_check_branch
        %189 = sbr.rel (%p186) target = $region12
      $region11: #{multi_head_attn_forward.3} parent=5 // pred_region
        %s190 = ssub.s32 %s14, 1
        // Predicated region
        $region13: #{multi_head_attn_forward.3} parent=11 // pred_check
          %p191 = pneg %p127
        $region14: #{multi_head_attn_forward.3} parent=11 // pred_check_branch
          %193 = sbr.rel (%p191) target = $region16
        $region15: #{multi_head_attn_forward.3} parent=11 // pred_region
          _
        $region16: #{multi_head_attn_forward.3} parent=11 // pred_fallthru
          _
        // Predicated region
        $region17: #{multi_head_attn_forward.3} parent=11 // pred_check
          %p194 = pneg %p148
        $region18: #{multi_head_attn_forward.3} parent=11 // pred_check_branch
          %196 = sbr.rel (%p194) target = $region20
        $region19: #{multi_head_attn_forward.3} parent=11 // pred_region
          _
        $region20: #{multi_head_attn_forward.3} parent=11 // pred_fallthru
          _
      $region12: #{multi_head_attn_forward.3} parent=5 // pred_fallthru
        _
      %p197 = scmp.lt.s32.totalorder %s14, 2
      // Predicated region
      $region21: #{multi_head_attn_forward.3} parent=5 // pred_check
        %p198 = pneg %p197
      $region22: #{multi_head_attn_forward.3} parent=5 // pred_check_branch
        %200 = sbr.rel (%p198) target = $region24
      $region23: #{multi_head_attn_forward.3} parent=5 // pred_region
        // Predicated region
        $region25: #{multi_head_attn_forward.3} parent=23 // pred_check
          %p201 = pneg %p48
        $region26: #{multi_head_attn_forward.3} parent=23 // pred_check_branch
          %203 = sbr.rel (%p201) target = $region28
        $region27: #{multi_head_attn_forward.3} parent=23 // pred_region
          %s204 = sand.u32 %s38, 1
          %s205 = sand.u32 %s38, 1
          %s206 = smul.addr %s205, 32
          %s207 = scalar_lea.vmem [#allocation2], %s206
          %s208 = smul.u32 8, %s22
          %s209 = smul.addr %s208, 3
          %s210 = smul.addr %s21, 24
          %s211 = sadd.s32 %s209, %s210
          %s212 = smul.addr %s211, 4
          %s213 = scalar_lea.vmem %s0, %s212
          // Predicated region
          $region29: #{multi_head_attn_forward.3} parent=27 // pred_check
            _
          $region30: #{multi_head_attn_forward.3} parent=27 // pred_check_branch
            %215 = sbr.rel (0) target = $region32
          $region31: #{multi_head_attn_forward.3} parent=27 // pred_region
            // Predicated region
            $region33: #{multi_head_attn_forward.3} parent=31 // pred_check
              _
            $region34: #{multi_head_attn_forward.3} parent=31 // pred_check_branch
              %217 = sbr.rel target = $region36
            $region35: #{multi_head_attn_forward.3} parent=31 // pred_region
              // Predicated region
              $region48: #{multi_head_attn_forward.3} parent=35 // pred_check
                _
              $region49: #{multi_head_attn_forward.3} parent=35 // pred_check_branch
                %247 = sbr.rel (0) target = $region51
              $region50: #{multi_head_attn_forward.3} parent=35 // pred_region
                loop: start=0, step=1, limit=1
                $region52: #{multi_head_attn_forward.3} parent=50 // loop_pre_header
                  _
                $region53: #{multi_head_attn_forward.3} parent=50 // loop_header
                  %s249 = sphi 0, %s253
                  %p250 = scmp.ge.s32.totalorder %s249, 1
                  %s254 = sphi %s213, %s213
                  %s255 = sphi %s207, %s207
                $region54: #{multi_head_attn_forward.3} parent=50 // loop_header_branch
                  %252 = sbr.rel (%p250) target = $region58
                $region55: #{multi_head_attn_forward.3} parent=50 // loop_body
                  _
                $region56: #{multi_head_attn_forward.3} parent=50 // loop_footer
                  %s253 = sadd.s32 1, %s249
                $region57: #{multi_head_attn_forward.3} parent=50 // loop_footer_branch
                  %248 = sbr.rel target = $region53
                $region58: #{multi_head_attn_forward.3} parent=50 // loop_exit
                  _
                %s257 = ssub.s32 16, 1
                loop: start=0, step=1, limit=1
                $region59: #{multi_head_attn_forward.3} parent=50 // loop_pre_header
                  _
                $region60: #{multi_head_attn_forward.3} parent=50 // loop_header
                  %s259 = sphi 0, %s263
                  %p260 = scmp.ge.s32.totalorder %s259, 1
                  %s264 = sphi %s213, %s213
                  %s265 = sphi %s207, %s207
                $region61: #{multi_head_attn_forward.3} parent=50 // loop_header_branch
                  %262 = sbr.rel (%p260) target = $region65
                $region62: #{multi_head_attn_forward.3} parent=50 // loop_body
                  %v266 = vld [vmem:[%s264] sm:%s257]
                  %267 = vst [vmem:[%s265] sm:%s257] %v266
                  %v268 = vld [vmem:[%s264 + $0xc] sm:%s257]
                  %269 = vst [vmem:[%s265 + $0x4] sm:%s257] %v268
                  %v270 = vld [vmem:[%s264 + $0x18] sm:%s257]
                  %271 = vst [vmem:[%s265 + $0x8] sm:%s257] %v270
                  %v272 = vld [vmem:[%s264 + $0x24] sm:%s257]
                  %273 = vst [vmem:[%s265 + $0xc] sm:%s257] %v272
                  %v274 = vld [vmem:[%s264 + $0x30] sm:%s257]
                  %275 = vst [vmem:[%s265 + $0x10] sm:%s257] %v274
                  %v276 = vld [vmem:[%s264 + $0x3c] sm:%s257]
                  %277 = vst [vmem:[%s265 + $0x14] sm:%s257] %v276
                  %v278 = vld [vmem:[%s264 + $0x48] sm:%s257]
                  %279 = vst [vmem:[%s265 + $0x18] sm:%s257] %v278
                  %v280 = vld [vmem:[%s264 + $0x54] sm:%s257]
                  %281 = vst [vmem:[%s265 + $0x1c] sm:%s257] %v280
                $region63: #{multi_head_attn_forward.3} parent=50 // loop_footer
                  %s263 = sadd.s32 1, %s259
                $region64: #{multi_head_attn_forward.3} parent=50 // loop_footer_branch
                  %258 = sbr.rel target = $region60
                $region65: #{multi_head_attn_forward.3} parent=50 // loop_exit
                  _
              $region51: #{multi_head_attn_forward.3} parent=35 // pred_fallthru
                _
            $region36: #{multi_head_attn_forward.3} parent=31 // pred_fallthru
              _
            // Predicated region
            $region37: #{multi_head_attn_forward.3} parent=31 // pred_check
              _
            $region38: #{multi_head_attn_forward.3} parent=31 // pred_check_branch
              %219 = sbr.rel (0) target = $region40
            $region39: #{multi_head_attn_forward.3} parent=31 // pred_region
              %s221 = ssub.s32 16, 1
              loop: start=0, step=1, limit=1
              $region41: #{multi_head_attn_forward.3} parent=39 // loop_pre_header
                _
              $region42: #{multi_head_attn_forward.3} parent=39 // loop_header
                %s223 = sphi 0, %s227
                %p224 = scmp.ge.s32.totalorder %s223, 1
                %s228 = sphi %s213, %s213
                %s229 = sphi %s207, %s207
              $region43: #{multi_head_attn_forward.3} parent=39 // loop_header_branch
                %226 = sbr.rel (%p224) target = $region47
              $region44: #{multi_head_attn_forward.3} parent=39 // loop_body
                %v230 = vld [vmem:[%s228] sm:%s221]
                %231 = vst [vmem:[%s229] sm:%s221] %v230
                %v232 = vld [vmem:[%s228 + $0xc] sm:%s221]
                %233 = vst [vmem:[%s229 + $0x4] sm:%s221] %v232
                %v234 = vld [vmem:[%s228 + $0x18] sm:%s221]
                %235 = vst [vmem:[%s229 + $0x8] sm:%s221] %v234
                %v236 = vld [vmem:[%s228 + $0x24] sm:%s221]
                %237 = vst [vmem:[%s229 + $0xc] sm:%s221] %v236
                %v238 = vld [vmem:[%s228 + $0x30] sm:%s221]
                %239 = vst [vmem:[%s229 + $0x10] sm:%s221] %v238
                %v240 = vld [vmem:[%s228 + $0x3c] sm:%s221]
                %241 = vst [vmem:[%s229 + $0x14] sm:%s221] %v240
                %v242 = vld [vmem:[%s228 + $0x48] sm:%s221]
                %243 = vst [vmem:[%s229 + $0x18] sm:%s221] %v242
                %v244 = vld [vmem:[%s228 + $0x54] sm:%s221]
                %245 = vst [vmem:[%s229 + $0x1c] sm:%s221] %v244
              $region45: #{multi_head_attn_forward.3} parent=39 // loop_footer
                %s227 = sadd.s32 1, %s223
              $region46: #{multi_head_attn_forward.3} parent=39 // loop_footer_branch
                %222 = sbr.rel target = $region42
              $region47: #{multi_head_attn_forward.3} parent=39 // loop_exit
                _
            $region40: #{multi_head_attn_forward.3} parent=31 // pred_fallthru
              _
          $region32: #{multi_head_attn_forward.3} parent=27 // pred_fallthru
            _
          %282 = vnop
        $region28: #{multi_head_attn_forward.3} parent=23 // pred_fallthru
          _
        // Predicated region
        $region66: #{multi_head_attn_forward.3} parent=23 // pred_check
          %p283 = pneg %p74
        $region67: #{multi_head_attn_forward.3} parent=23 // pred_check_branch
          %285 = sbr.rel (%p283) target = $region69
        $region68: #{multi_head_attn_forward.3} parent=23 // pred_region
          %s286 = sand.u32 %s64, 1
          %s287 = sand.u32 %s64, 1
          %s288 = smul.addr %s287, 32
          %s289 = scalar_lea.vmem [#allocation3], %s288
          %s290 = smul.addr %s21, 24
          %s291 = sadd.s32 1, %s290
          %s292 = smul.addr %s291, 4
          %s293 = scalar_lea.vmem %s1, %s292
          // Predicated region
          $region70: #{multi_head_attn_forward.3} parent=68 // pred_check
            _
          $region71: #{multi_head_attn_forward.3} parent=68 // pred_check_branch
            %295 = sbr.rel (0) target = $region73
          $region72: #{multi_head_attn_forward.3} parent=68 // pred_region
            // Predicated region
            $region74: #{multi_head_attn_forward.3} parent=72 // pred_check
              _
            $region75: #{multi_head_attn_forward.3} parent=72 // pred_check_branch
              %297 = sbr.rel target = $region77
            $region76: #{multi_head_attn_forward.3} parent=72 // pred_region
              // Predicated region
              $region89: #{multi_head_attn_forward.3} parent=76 // pred_check
                _
              $region90: #{multi_head_attn_forward.3} parent=76 // pred_check_branch
                %327 = sbr.rel (0) target = $region92
              $region91: #{multi_head_attn_forward.3} parent=76 // pred_region
                loop: start=0, step=1, limit=1
                $region93: #{multi_head_attn_forward.3} parent=91 // loop_pre_header
                  _
                $region94: #{multi_head_attn_forward.3} parent=91 // loop_header
                  %s329 = sphi 0, %s333
                  %p330 = scmp.ge.s32.totalorder %s329, 1
                  %s334 = sphi %s293, %s293
                  %s335 = sphi %s289, %s289
                $region95: #{multi_head_attn_forward.3} parent=91 // loop_header_branch
                  %332 = sbr.rel (%p330) target = $region99
                $region96: #{multi_head_attn_forward.3} parent=91 // loop_body
                  _
                $region97: #{multi_head_attn_forward.3} parent=91 // loop_footer
                  %s333 = sadd.s32 1, %s329
                $region98: #{multi_head_attn_forward.3} parent=91 // loop_footer_branch
                  %328 = sbr.rel target = $region94
                $region99: #{multi_head_attn_forward.3} parent=91 // loop_exit
                  _
                %s337 = ssub.s32 16, 1
                loop: start=0, step=1, limit=1
                $region100: #{multi_head_attn_forward.3} parent=91 // loop_pre_header
                  _
                $region101: #{multi_head_attn_forward.3} parent=91 // loop_header
                  %s339 = sphi 0, %s343
                  %p340 = scmp.ge.s32.totalorder %s339, 1
                  %s344 = sphi %s293, %s293
                  %s345 = sphi %s289, %s289
                $region102: #{multi_head_attn_forward.3} parent=91 // loop_header_branch
                  %342 = sbr.rel (%p340) target = $region106
                $region103: #{multi_head_attn_forward.3} parent=91 // loop_body
                  %v346 = vld [vmem:[%s344] sm:%s337]
                  %347 = vst [vmem:[%s345] sm:%s337] %v346
                  %v348 = vld [vmem:[%s344 + $0xc] sm:%s337]
                  %349 = vst [vmem:[%s345 + $0x4] sm:%s337] %v348
                  %v350 = vld [vmem:[%s344 + $0x18] sm:%s337]
                  %351 = vst [vmem:[%s345 + $0x8] sm:%s337] %v350
                  %v352 = vld [vmem:[%s344 + $0x24] sm:%s337]
                  %353 = vst [vmem:[%s345 + $0xc] sm:%s337] %v352
                  %v354 = vld [vmem:[%s344 + $0x30] sm:%s337]
                  %355 = vst [vmem:[%s345 + $0x10] sm:%s337] %v354
                  %v356 = vld [vmem:[%s344 + $0x3c] sm:%s337]
                  %357 = vst [vmem:[%s345 + $0x14] sm:%s337] %v356
                  %v358 = vld [vmem:[%s344 + $0x48] sm:%s337]
                  %359 = vst [vmem:[%s345 + $0x18] sm:%s337] %v358
                  %v360 = vld [vmem:[%s344 + $0x54] sm:%s337]
                  %361 = vst [vmem:[%s345 + $0x1c] sm:%s337] %v360
                $region104: #{multi_head_attn_forward.3} parent=91 // loop_footer
                  %s343 = sadd.s32 1, %s339
                $region105: #{multi_head_attn_forward.3} parent=91 // loop_footer_branch
                  %338 = sbr.rel target = $region101
                $region106: #{multi_head_attn_forward.3} parent=91 // loop_exit
                  _
              $region92: #{multi_head_attn_forward.3} parent=76 // pred_fallthru
                _
            $region77: #{multi_head_attn_forward.3} parent=72 // pred_fallthru
              _
            // Predicated region
            $region78: #{multi_head_attn_forward.3} parent=72 // pred_check
              _
            $region79: #{multi_head_attn_forward.3} parent=72 // pred_check_branch
              %299 = sbr.rel (0) target = $region81
            $region80: #{multi_head_attn_forward.3} parent=72 // pred_region
              %s301 = ssub.s32 16, 1
              loop: start=0, step=1, limit=1
              $region82: #{multi_head_attn_forward.3} parent=80 // loop_pre_header
                _
              $region83: #{multi_head_attn_forward.3} parent=80 // loop_header
                %s303 = sphi 0, %s307
                %p304 = scmp.ge.s32.totalorder %s303, 1
                %s308 = sphi %s293, %s293
                %s309 = sphi %s289, %s289
              $region84: #{multi_head_attn_forward.3} parent=80 // loop_header_branch
                %306 = sbr.rel (%p304) target = $region88
              $region85: #{multi_head_attn_forward.3} parent=80 // loop_body
                %v310 = vld [vmem:[%s308] sm:%s301]
                %311 = vst [vmem:[%s309] sm:%s301] %v310
                %v312 = vld [vmem:[%s308 + $0xc] sm:%s301]
                %313 = vst [vmem:[%s309 + $0x4] sm:%s301] %v312
                %v314 = vld [vmem:[%s308 + $0x18] sm:%s301]
                %315 = vst [vmem:[%s309 + $0x8] sm:%s301] %v314
                %v316 = vld [vmem:[%s308 + $0x24] sm:%s301]
                %317 = vst [vmem:[%s309 + $0xc] sm:%s301] %v316
                %v318 = vld [vmem:[%s308 + $0x30] sm:%s301]
                %319 = vst [vmem:[%s309 + $0x10] sm:%s301] %v318
                %v320 = vld [vmem:[%s308 + $0x3c] sm:%s301]
                %321 = vst [vmem:[%s309 + $0x14] sm:%s301] %v320
                %v322 = vld [vmem:[%s308 + $0x48] sm:%s301]
                %323 = vst [vmem:[%s309 + $0x18] sm:%s301] %v322
                %v324 = vld [vmem:[%s308 + $0x54] sm:%s301]
                %325 = vst [vmem:[%s309 + $0x1c] sm:%s301] %v324
              $region86: #{multi_head_attn_forward.3} parent=80 // loop_footer
                %s307 = sadd.s32 1, %s303
              $region87: #{multi_head_attn_forward.3} parent=80 // loop_footer_branch
                %302 = sbr.rel target = $region83
              $region88: #{multi_head_attn_forward.3} parent=80 // loop_exit
                _
            $region81: #{multi_head_attn_forward.3} parent=72 // pred_fallthru
              _
          $region73: #{multi_head_attn_forward.3} parent=68 // pred_fallthru
            _
          %362 = vnop
        $region69: #{multi_head_attn_forward.3} parent=23 // pred_fallthru
          _
        // Predicated region
        $region107: #{multi_head_attn_forward.3} parent=23 // pred_check
          %p363 = pneg %p100
        $region108: #{multi_head_attn_forward.3} parent=23 // pred_check_branch
          %365 = sbr.rel (%p363) target = $region110
        $region109: #{multi_head_attn_forward.3} parent=23 // pred_region
          %s366 = sand.u32 %s90, 1
          %s367 = sand.u32 %s90, 1
          %s368 = smul.addr %s367, 32
          %s369 = scalar_lea.vmem [#allocation4], %s368
          %s370 = smul.addr %s21, 24
          %s371 = sadd.s32 2, %s370
          %s372 = smul.addr %s371, 4
          %s373 = scalar_lea.vmem %s2, %s372
          // Predicated region
          $region111: #{multi_head_attn_forward.3} parent=109 // pred_check
            _
          $region112: #{multi_head_attn_forward.3} parent=109 // pred_check_branch
            %375 = sbr.rel (0) target = $region114
          $region113: #{multi_head_attn_forward.3} parent=109 // pred_region
            // Predicated region
            $region115: #{multi_head_attn_forward.3} parent=113 // pred_check
              _
            $region116: #{multi_head_attn_forward.3} parent=113 // pred_check_branch
              %377 = sbr.rel target = $region118
            $region117: #{multi_head_attn_forward.3} parent=113 // pred_region
              // Predicated region
              $region130: #{multi_head_attn_forward.3} parent=117 // pred_check
                _
              $region131: #{multi_head_attn_forward.3} parent=117 // pred_check_branch
                %407 = sbr.rel (0) target = $region133
              $region132: #{multi_head_attn_forward.3} parent=117 // pred_region
                loop: start=0, step=1, limit=1
                $region134: #{multi_head_attn_forward.3} parent=132 // loop_pre_header
                  _
                $region135: #{multi_head_attn_forward.3} parent=132 // loop_header
                  %s409 = sphi 0, %s413
                  %p410 = scmp.ge.s32.totalorder %s409, 1
                  %s414 = sphi %s373, %s373
                  %s415 = sphi %s369, %s369
                $region136: #{multi_head_attn_forward.3} parent=132 // loop_header_branch
                  %412 = sbr.rel (%p410) target = $region140
                $region137: #{multi_head_attn_forward.3} parent=132 // loop_body
                  _
                $region138: #{multi_head_attn_forward.3} parent=132 // loop_footer
                  %s413 = sadd.s32 1, %s409
                $region139: #{multi_head_attn_forward.3} parent=132 // loop_footer_branch
                  %408 = sbr.rel target = $region135
                $region140: #{multi_head_attn_forward.3} parent=132 // loop_exit
                  _
                %s417 = ssub.s32 16, 1
                loop: start=0, step=1, limit=1
                $region141: #{multi_head_attn_forward.3} parent=132 // loop_pre_header
                  _
                $region142: #{multi_head_attn_forward.3} parent=132 // loop_header
                  %s419 = sphi 0, %s423
                  %p420 = scmp.ge.s32.totalorder %s419, 1
                  %s424 = sphi %s373, %s373
                  %s425 = sphi %s369, %s369
                $region143: #{multi_head_attn_forward.3} parent=132 // loop_header_branch
                  %422 = sbr.rel (%p420) target = $region147
                $region144: #{multi_head_attn_forward.3} parent=132 // loop_body
                  %v426 = vld [vmem:[%s424] sm:%s417]
                  %427 = vst [vmem:[%s425] sm:%s417] %v426
                  %v428 = vld [vmem:[%s424 + $0xc] sm:%s417]
                  %429 = vst [vmem:[%s425 + $0x4] sm:%s417] %v428
                  %v430 = vld [vmem:[%s424 + $0x18] sm:%s417]
                  %431 = vst [vmem:[%s425 + $0x8] sm:%s417] %v430
                  %v432 = vld [vmem:[%s424 + $0x24] sm:%s417]
                  %433 = vst [vmem:[%s425 + $0xc] sm:%s417] %v432
                  %v434 = vld [vmem:[%s424 + $0x30] sm:%s417]
                  %435 = vst [vmem:[%s425 + $0x10] sm:%s417] %v434
                  %v436 = vld [vmem:[%s424 + $0x3c] sm:%s417]
                  %437 = vst [vmem:[%s425 + $0x14] sm:%s417] %v436
                  %v438 = vld [vmem:[%s424 + $0x48] sm:%s417]
                  %439 = vst [vmem:[%s425 + $0x18] sm:%s417] %v438
                  %v440 = vld [vmem:[%s424 + $0x54] sm:%s417]
                  %441 = vst [vmem:[%s425 + $0x1c] sm:%s417] %v440
                $region145: #{multi_head_attn_forward.3} parent=132 // loop_footer
                  %s423 = sadd.s32 1, %s419
                $region146: #{multi_head_attn_forward.3} parent=132 // loop_footer_branch
                  %418 = sbr.rel target = $region142
                $region147: #{multi_head_attn_forward.3} parent=132 // loop_exit
                  _
              $region133: #{multi_head_attn_forward.3} parent=117 // pred_fallthru
                _
            $region118: #{multi_head_attn_forward.3} parent=113 // pred_fallthru
              _
            // Predicated region
            $region119: #{multi_head_attn_forward.3} parent=113 // pred_check
              _
            $region120: #{multi_head_attn_forward.3} parent=113 // pred_check_branch
              %379 = sbr.rel (0) target = $region122
            $region121: #{multi_head_attn_forward.3} parent=113 // pred_region
              %s381 = ssub.s32 16, 1
              loop: start=0, step=1, limit=1
              $region123: #{multi_head_attn_forward.3} parent=121 // loop_pre_header
                _
              $region124: #{multi_head_attn_forward.3} parent=121 // loop_header
                %s383 = sphi 0, %s387
                %p384 = scmp.ge.s32.totalorder %s383, 1
                %s388 = sphi %s373, %s373
                %s389 = sphi %s369, %s369
              $region125: #{multi_head_attn_forward.3} parent=121 // loop_header_branch
                %386 = sbr.rel (%p384) target = $region129
              $region126: #{multi_head_attn_forward.3} parent=121 // loop_body
                %v390 = vld [vmem:[%s388] sm:%s381]
                %391 = vst [vmem:[%s389] sm:%s381] %v390
                %v392 = vld [vmem:[%s388 + $0xc] sm:%s381]
                %393 = vst [vmem:[%s389 + $0x4] sm:%s381] %v392
                %v394 = vld [vmem:[%s388 + $0x18] sm:%s381]
                %395 = vst [vmem:[%s389 + $0x8] sm:%s381] %v394
                %v396 = vld [vmem:[%s388 + $0x24] sm:%s381]
                %397 = vst [vmem:[%s389 + $0xc] sm:%s381] %v396
                %v398 = vld [vmem:[%s388 + $0x30] sm:%s381]
                %399 = vst [vmem:[%s389 + $0x10] sm:%s381] %v398
                %v400 = vld [vmem:[%s388 + $0x3c] sm:%s381]
                %401 = vst [vmem:[%s389 + $0x14] sm:%s381] %v400
                %v402 = vld [vmem:[%s388 + $0x48] sm:%s381]
                %403 = vst [vmem:[%s389 + $0x18] sm:%s381] %v402
                %v404 = vld [vmem:[%s388 + $0x54] sm:%s381]
                %405 = vst [vmem:[%s389 + $0x1c] sm:%s381] %v404
              $region127: #{multi_head_attn_forward.3} parent=121 // loop_footer
                %s387 = sadd.s32 1, %s383
              $region128: #{multi_head_attn_forward.3} parent=121 // loop_footer_branch
                %382 = sbr.rel target = $region124
              $region129: #{multi_head_attn_forward.3} parent=121 // loop_exit
                _
            $region122: #{multi_head_attn_forward.3} parent=113 // pred_fallthru
              _
          $region114: #{multi_head_attn_forward.3} parent=109 // pred_fallthru
            _
          %442 = vnop
        $region110: #{multi_head_attn_forward.3} parent=23 // pred_fallthru
          _
      $region24: #{multi_head_attn_forward.3} parent=5 // pred_fallthru
        _
      %p443 = scmp.le.s32.totalorder 1, %s14
      %p444 = scmp.lt.s32.totalorder %s14, 3
      %p445 = pnand %p443, %p444
      %p446 = pneg %p445
      // Predicated region
      $region148: #{multi_head_attn_forward.3} parent=5 // pred_check
        _
      $region149: #{multi_head_attn_forward.3} parent=5 // pred_check_branch
        %448 = sbr.rel (%p445) target = $region151
      $region150: #{multi_head_attn_forward.3} parent=5 // pred_region
        %s449 = ssub.s32 %s14, 1
        %s450 = sand.u32 %s41, 1
        %s451 = sand.u32 %s41, 1
        %s452 = smul.addr %s451, 32
        %s453 = scalar_lea.vmem [#allocation2], %s452
        // Predicated region
        $region152: #{multi_head_attn_forward.3} parent=150 // pred_check
          %p454 = pneg %p54
        $region153: #{multi_head_attn_forward.3} parent=150 // pred_check_branch
          %456 = sbr.rel (%p454) target = $region155
        $region154: #{multi_head_attn_forward.3} parent=150 // pred_region
          _
        $region155: #{multi_head_attn_forward.3} parent=150 // pred_fallthru
          _
        %s457 = sand.u32 %s67, 1
        %s458 = sand.u32 %s67, 1
        %s459 = smul.addr %s458, 32
        %s460 = scalar_lea.vmem [#allocation3], %s459
        // Predicated region
        $region156: #{multi_head_attn_forward.3} parent=150 // pred_check
          %p461 = pneg %p80
        $region157: #{multi_head_attn_forward.3} parent=150 // pred_check_branch
          %463 = sbr.rel (%p461) target = $region159
        $region158: #{multi_head_attn_forward.3} parent=150 // pred_region
          _
        $region159: #{multi_head_attn_forward.3} parent=150 // pred_fallthru
          _
        %s464 = sand.u32 %s93, 1
        %s465 = sand.u32 %s93, 1
        %s466 = smul.addr %s465, 32
        %s467 = scalar_lea.vmem [#allocation4], %s466
        // Predicated region
        $region160: #{multi_head_attn_forward.3} parent=150 // pred_check
          %p468 = pneg %p106
        $region161: #{multi_head_attn_forward.3} parent=150 // pred_check_branch
          %470 = sbr.rel (%p468) target = $region163
        $region162: #{multi_head_attn_forward.3} parent=150 // pred_region
          _
        $region163: #{multi_head_attn_forward.3} parent=150 // pred_fallthru
          _
        %s471 = sand.u32 %s41, 1
        %s472 = sand.u32 %s41, 1
        %s473 = smul.addr %s472, 32
        %s474 = scalar_lea.vmem [#allocation2], %s473
        %p475 = pneg %p54
        %p476 = pneg %p51
        %s477 = sand.u32 %s67, 1
        %s478 = sand.u32 %s67, 1
        %s479 = smul.addr %s478, 32
        %s480 = scalar_lea.vmem [#allocation3], %s479
        %p481 = pneg %p80
        %p482 = pneg %p77
        %s483 = sand.u32 %s93, 1
        %s484 = sand.u32 %s93, 1
        %s485 = smul.addr %s484, 32
        %s486 = scalar_lea.vmem [#allocation4], %s485
        %p487 = pneg %p106
        %p488 = pneg %p103
        %p489 = pneg %p127
        %p490 = pneg %p124
        %p491 = pneg %p148
        %p492 = pneg %p145
        %p493 = pneg %p176
        %p494 = pneg %p173
        %s495 = sand.u32 %s163, 1
        %s496 = scalar_lea.sflag [#allocation6], %s495
        %s497 = sand.u32 %s163, 1
        %s498 = smul.addr %s497, 8
        %s499 = scalar_lea.vmem [#allocation5], %s498
        %s500 = smul.u32 8, %s24
        %v501 = vld [vmem:[%s453] sm:$0xf]
        %v502 = vld [vmem:[%s453 + $0x4] sm:$0xf]
        %v503 = vld [vmem:[%s453 + $0x8] sm:$0xf]
        %v504 = vld [vmem:[%s453 + $0xc] sm:$0xf]
        %v505 = vld [vmem:[%s453 + $0x10] sm:$0xf]
        %v506 = vld [vmem:[%s453 + $0x14] sm:$0xf]
        %v507 = vld [vmem:[%s453 + $0x18] sm:$0xf]
        %v508 = vld [vmem:[%s453 + $0x1c] sm:$0xf]
        %v509 = vld [vmem:[%s460] sm:$0xf]
        %v510 = vld [vmem:[%s460 + $0x4] sm:$0xf]
        %v511 = vld [vmem:[%s460 + $0x8] sm:$0xf]
        %v512 = vld [vmem:[%s460 + $0xc] sm:$0xf]
        %v513 = vld [vmem:[%s460 + $0x10] sm:$0xf]
        %v514 = vld [vmem:[%s460 + $0x14] sm:$0xf]
        %v515 = vld [vmem:[%s460 + $0x18] sm:$0xf]
        %v516 = vld [vmem:[%s460 + $0x1c] sm:$0xf]
        %v517 = vld [vmem:[%s467] sm:$0xf]
        %v518 = vld [vmem:[%s467 + $0x4] sm:$0xf]
        %v519 = vld [vmem:[%s467 + $0x8] sm:$0xf]
        %v520 = vld [vmem:[%s467 + $0xc] sm:$0xf]
        %v521 = vld [vmem:[%s467 + $0x10] sm:$0xf]
        %v522 = vld [vmem:[%s467 + $0x14] sm:$0xf]
        %v523 = vld [vmem:[%s467 + $0x18] sm:$0xf]
        %v524 = vld [vmem:[%s467 + $0x1c] sm:$0xf]
        %v525 = vld [vmem:[%s3] sm:$0xff]
        %v526 = vld [vmem:[%s3 + $0x8] sm:$0xff]
        %v527 = vld [vmem:[%s3 + $0x10] sm:$0xff]
        %v528 = vld [vmem:[%s3 + $0x18] sm:$0xff]
        %v537 = vrot.slane %v502, 7
        %vm538 = vcmask 1041409
        %v539 = vsel %vm538, %v537, %v501
        %v540 = vrot.slane %v503, 6
        %vm541 = vcmask 1042434
        %v542 = vsel %vm541, %v540, %v539
        %v543 = vrot.slane %v504, 5
        %vm544 = vcmask 1043459
        %v545 = vsel %vm544, %v543, %v542
        %v546 = vrot.slane %v505, 4
        %vm547 = vcmask 1044484
        %v548 = vsel %vm547, %v546, %v545
        %v549 = vrot.slane %v506, 3
        %vm550 = vcmask 1045509
        %v551 = vsel %vm550, %v549, %v548
        %v552 = vrot.slane %v507, 2
        %vm553 = vcmask 1046534
        %v554 = vsel %vm553, %v552, %v551
        %v555 = vrot.slane %v508, 1
        %vm556 = vcmask 1047559
        %v557 = vsel %vm556, %v555, %v554
        %v566 = vrot.slane %v510, 7
        %v567 = vsel %vm538, %v566, %v509
        %v568 = vrot.slane %v511, 6
        %v569 = vsel %vm541, %v568, %v567
        %v570 = vrot.slane %v512, 5
        %v571 = vsel %vm544, %v570, %v569
        %v572 = vrot.slane %v513, 4
        %v573 = vsel %vm547, %v572, %v571
        %v574 = vrot.slane %v514, 3
        %v575 = vsel %vm550, %v574, %v573
        %v576 = vrot.slane %v515, 2
        %v577 = vsel %vm553, %v576, %v575
        %v578 = vrot.slane %v516, 1
        %v579 = vsel %vm556, %v578, %v577
        %vm580 = vcmask 64512
        %v581 = vsel %vm580, %v557, 0
        %v583 = vsel %vm580, %v579, 0
        %585 = vmatprep.subr.mxu0 0.0
        %586 = vmatpush1.xpose.msra.mxu0 0.0
        %587 = vmatprep.subr.mxu0 0.0
        %588 = vmatpush1.xpose.msra.mxu0 0.0
        %589 = vmatprep.subr.mxu0 0.0
        %590 = vmatpush1.xpose.msra.mxu0 0.0
        %591 = vmatprep.subr.mxu0 0.0
        %592 = vmatpush1.xpose.msra.mxu0 0.0
        %593 = vmatprep.subr.mxu0 0.0
        %594 = vmatpush1.xpose.msra.mxu0 0.0
        %595 = vmatprep.subr.mxu0 0.0
        %596 = vmatpush1.xpose.msra.mxu0 0.0
        %597 = vmatprep.subr.mxu0 0.0
        %598 = vmatpush1.xpose.msra.mxu0 0.0
        %599 = vmatprep.subr.mxu0 0.0
        %600 = vmatpush1.xpose.msra.mxu0 0.0
        %601 = vmatprep.subr.mxu0 0.0
        %602 = vmatpush1.xpose.msra.mxu0 0.0
        %603 = vmatprep.subr.mxu0 0.0
        %604 = vmatpush1.xpose.msra.mxu0 0.0
        %605 = vmatprep.subr.mxu0 0.0
        %606 = vmatpush1.xpose.msra.mxu0 0.0
        %607 = vmatprep.subr.mxu0 0.0
        %608 = vmatpush1.xpose.msra.mxu0 0.0
        %609 = vmatprep.subr.mxu0 0.0
        %610 = vmatpush1.xpose.msra.mxu0 0.0
        %611 = vmatprep.subr.mxu0 0.0
        %612 = vmatpush1.xpose.msra.mxu0 0.0
        %613 = vmatprep.subr.mxu0 0.0
        %614 = vmatpush1.xpose.msra.mxu0 0.0
        %615 = vmatprep.subr.mxu0 0.0
        %616 = vmatpush1.xpose.msra.mxu0 %v583
        %617 = vmatprep.subr.mxu0 0.0
        %618 = vmatpush2.xpose.msra.mxu0 0.0
        %619 = vmatprep.subr.mxu0 0.0
        %620 = vmatpush2.xpose.msra.mxu0 0.0
        %621 = vmatprep.subr.mxu0 0.0
        %622 = vmatpush2.xpose.msra.mxu0 0.0
        %623 = vmatprep.subr.mxu0 0.0
        %624 = vmatpush2.xpose.msra.mxu0 0.0
        %625 = vmatprep.subr.mxu0 0.0
        %626 = vmatpush2.xpose.msra.mxu0 0.0
        %627 = vmatprep.subr.mxu0 0.0
        %628 = vmatpush2.xpose.msra.mxu0 0.0
        %629 = vmatprep.subr.mxu0 0.0
        %630 = vmatpush2.xpose.msra.mxu0 0.0
        %631 = vmatprep.subr.mxu0 0.0
        %632 = vmatpush2.xpose.msra.mxu0 0.0
        %633 = vmatprep.subr.mxu0 0.0
        %634 = vmatpush2.xpose.msra.mxu0 0.0
        %635 = vmatprep.subr.mxu0 0.0
        %636 = vmatpush2.xpose.msra.mxu0 0.0
        %637 = vmatprep.subr.mxu0 0.0
        %638 = vmatpush2.xpose.msra.mxu0 0.0
        %639 = vmatprep.subr.mxu0 0.0
        %640 = vmatpush2.xpose.msra.mxu0 0.0
        %641 = vmatprep.subr.mxu0 0.0
        %642 = vmatpush2.xpose.msra.mxu0 0.0
        %643 = vmatprep.subr.mxu0 0.0
        %644 = vmatpush2.xpose.msra.mxu0 0.0
        %645 = vmatprep.subr.mxu0 0.0
        %646 = vmatpush2.xpose.msra.mxu0 0.0
        %647 = vmatprep.subr.mxu0 0.0
        %648 = vmatpush2.xpose.msra.mxu0 0.0
        %649 = vmatprep.mubr.f32.mxu0 0.0
        %650 = vmatmul.mubr.f32.gmra.mxu0 %v581
        %v651 = vpop.f32.mrf.mxu0
        %v652 = vadd.f32 0.0, %v651
        %v653 = vpop.f32.mrf.mxu0
        %654 = vdwg.mxu0
        %v655 = vsel %vm580, %v652, -inf
        %656 = vmax.xlane.f32.xlu0 %v655
        %v657 = vpop.xlane.xlu0 %656
        %v658 = vsub.f32 %v652, %v657
        %v659 = vmul.f32 %v658, 1.442695
        %v660 = vpow.pop %v659
        %v661 = vsel %vm580, %v660, 0.0
        %662 = vadd.xlane.f32.xlu0 %v661
        %v663 = vpop.xlane.xlu0 %662
        %v664 = vrcp.pop %v663
        %v665 = vmul.f32 %v660, %v664
        %v674 = vrot.slane %v518, 7
        %v675 = vsel %vm538, %v674, %v517
        %v676 = vrot.slane %v519, 6
        %v677 = vsel %vm541, %v676, %v675
        %v678 = vrot.slane %v520, 5
        %v679 = vsel %vm544, %v678, %v677
        %v680 = vrot.slane %v521, 4
        %v681 = vsel %vm547, %v680, %v679
        %v682 = vrot.slane %v522, 3
        %v683 = vsel %vm550, %v682, %v681
        %v684 = vrot.slane %v523, 2
        %v685 = vsel %vm553, %v684, %v683
        %v686 = vrot.slane %v524, 1
        %v687 = vsel %vm556, %v686, %v685
        %v690 = vsel %vm580, %v665, 0
        %692 = vmatprep.subr.mxu0 0.0
        %693 = vmatpush1.msra.mxu0 0.0
        %694 = vmatprep.subr.mxu0 0.0
        %695 = vmatpush1.msra.mxu0 0.0
        %696 = vmatprep.subr.mxu0 0.0
        %697 = vmatpush1.msra.mxu0 0.0
        %698 = vmatprep.subr.mxu0 0.0
        %699 = vmatpush1.msra.mxu0 0.0
        %700 = vmatprep.subr.mxu0 0.0
        %701 = vmatpush1.msra.mxu0 0.0
        %702 = vmatprep.subr.mxu0 0.0
        %703 = vmatpush1.msra.mxu0 0.0
        %704 = vmatprep.subr.mxu0 0.0
        %705 = vmatpush1.msra.mxu0 0.0
        %706 = vmatprep.subr.mxu0 0.0
        %707 = vmatpush1.msra.mxu0 0.0
        %708 = vmatprep.subr.mxu0 0.0
        %709 = vmatpush1.msra.mxu0 0.0
        %710 = vmatprep.subr.mxu0 0.0
        %711 = vmatpush1.msra.mxu0 0.0
        %712 = vmatprep.subr.mxu0 0.0
        %713 = vmatpush1.msra.mxu0 0.0
        %714 = vmatprep.subr.mxu0 0.0
        %715 = vmatpush1.msra.mxu0 0.0
        %716 = vmatprep.subr.mxu0 0.0
        %717 = vmatpush1.msra.mxu0 0.0
        %718 = vmatprep.subr.mxu0 0.0
        %719 = vmatpush1.msra.mxu0 0.0
        %720 = vmatprep.subr.mxu0 0.0
        %721 = vmatpush1.msra.mxu0 0.0
        %722 = vmatprep.subr.mxu0 0.0
        %723 = vmatpush1.msra.mxu0 %v687
        %724 = vmatprep.subr.mxu0 0.0
        %725 = vmatpush2.msra.mxu0 0.0
        %726 = vmatprep.subr.mxu0 0.0
        %727 = vmatpush2.msra.mxu0 0.0
        %728 = vmatprep.subr.mxu0 0.0
        %729 = vmatpush2.msra.mxu0 0.0
        %730 = vmatprep.subr.mxu0 0.0
        %731 = vmatpush2.msra.mxu0 0.0
        %732 = vmatprep.subr.mxu0 0.0
        %733 = vmatpush2.msra.mxu0 0.0
        %734 = vmatprep.subr.mxu0 0.0
        %735 = vmatpush2.msra.mxu0 0.0
        %736 = vmatprep.subr.mxu0 0.0
        %737 = vmatpush2.msra.mxu0 0.0
        %738 = vmatprep.subr.mxu0 0.0
        %739 = vmatpush2.msra.mxu0 0.0
        %740 = vmatprep.subr.mxu0 0.0
        %741 = vmatpush2.msra.mxu0 0.0
        %742 = vmatprep.subr.mxu0 0.0
        %743 = vmatpush2.msra.mxu0 0.0
        %744 = vmatprep.subr.mxu0 0.0
        %745 = vmatpush2.msra.mxu0 0.0
        %746 = vmatprep.subr.mxu0 0.0
        %747 = vmatpush2.msra.mxu0 0.0
        %748 = vmatprep.subr.mxu0 0.0
        %749 = vmatpush2.msra.mxu0 0.0
        %750 = vmatprep.subr.mxu0 0.0
        %751 = vmatpush2.msra.mxu0 0.0
        %752 = vmatprep.subr.mxu0 0.0
        %753 = vmatpush2.msra.mxu0 0.0
        %754 = vmatprep.subr.mxu0 0.0
        %755 = vmatpush2.msra.mxu0 0.0
        %756 = vmatprep.mubr.f32.mxu0 0.0
        %757 = vmatmul.mubr.f32.gmra.mxu0 %v690
        %v758 = vpop.f32.mrf.mxu0
        %v759 = vadd.f32 0.0, %v758
        %v760 = vpop.f32.mrf.mxu0
        %761 = vdwg.mxu0
        %v762 = vrot.slane %v501, 1
        %v763 = vsel %vm538, %v502, %v762
        %v764 = vrot.slane %v503, 7
        %v765 = vsel %vm541, %v764, %v763
        %v766 = vrot.slane %v504, 6
        %v767 = vsel %vm544, %v766, %v765
        %v768 = vrot.slane %v505, 5
        %v769 = vsel %vm547, %v768, %v767
        %v770 = vrot.slane %v506, 4
        %v771 = vsel %vm550, %v770, %v769
        %v772 = vrot.slane %v507, 3
        %v773 = vsel %vm553, %v772, %v771
        %v774 = vrot.slane %v508, 2
        %v775 = vsel %vm556, %v774, %v773
        %v776 = vrot.slane %v509, 1
        %v777 = vsel %vm538, %v510, %v776
        %v778 = vrot.slane %v511, 7
        %v779 = vsel %vm541, %v778, %v777
        %v780 = vrot.slane %v512, 6
        %v781 = vsel %vm544, %v780, %v779
        %v782 = vrot.slane %v513, 5
        %v783 = vsel %vm547, %v782, %v781
        %v784 = vrot.slane %v514, 4
        %v785 = vsel %vm550, %v784, %v783
        %v786 = vrot.slane %v515, 3
        %v787 = vsel %vm553, %v786, %v785
        %v788 = vrot.slane %v516, 2
        %v789 = vsel %vm556, %v788, %v787
        %v790 = vsel %vm580, %v775, 0
        %v792 = vsel %vm580, %v789, 0
        %794 = vmatprep.subr.mxu0 0.0
        %795 = vmatpush1.xpose.msra.mxu0 0.0
        %796 = vmatprep.subr.mxu0 0.0
        %797 = vmatpush1.xpose.msra.mxu0 0.0
        %798 = vmatprep.subr.mxu0 0.0
        %799 = vmatpush1.xpose.msra.mxu0 0.0
        %800 = vmatprep.subr.mxu0 0.0
        %801 = vmatpush1.xpose.msra.mxu0 0.0
        %802 = vmatprep.subr.mxu0 0.0
        %803 = vmatpush1.xpose.msra.mxu0 0.0
        %804 = vmatprep.subr.mxu0 0.0
        %805 = vmatpush1.xpose.msra.mxu0 0.0
        %806 = vmatprep.subr.mxu0 0.0
        %807 = vmatpush1.xpose.msra.mxu0 0.0
        %808 = vmatprep.subr.mxu0 0.0
        %809 = vmatpush1.xpose.msra.mxu0 0.0
        %810 = vmatprep.subr.mxu0 0.0
        %811 = vmatpush1.xpose.msra.mxu0 0.0
        %812 = vmatprep.subr.mxu0 0.0
        %813 = vmatpush1.xpose.msra.mxu0 0.0
        %814 = vmatprep.subr.mxu0 0.0
        %815 = vmatpush1.xpose.msra.mxu0 0.0
        %816 = vmatprep.subr.mxu0 0.0
        %817 = vmatpush1.xpose.msra.mxu0 0.0
        %818 = vmatprep.subr.mxu0 0.0
        %819 = vmatpush1.xpose.msra.mxu0 0.0
        %820 = vmatprep.subr.mxu0 0.0
        %821 = vmatpush1.xpose.msra.mxu0 0.0
        %822 = vmatprep.subr.mxu0 0.0
        %823 = vmatpush1.xpose.msra.mxu0 0.0
        %824 = vmatprep.subr.mxu0 0.0
        %825 = vmatpush1.xpose.msra.mxu0 %v792
        %826 = vmatprep.subr.mxu0 0.0
        %827 = vmatpush2.xpose.msra.mxu0 0.0
        %828 = vmatprep.subr.mxu0 0.0
        %829 = vmatpush2.xpose.msra.mxu0 0.0
        %830 = vmatprep.subr.mxu0 0.0
        %831 = vmatpush2.xpose.msra.mxu0 0.0
        %832 = vmatprep.subr.mxu0 0.0
        %833 = vmatpush2.xpose.msra.mxu0 0.0
        %834 = vmatprep.subr.mxu0 0.0
        %835 = vmatpush2.xpose.msra.mxu0 0.0
        %836 = vmatprep.subr.mxu0 0.0
        %837 = vmatpush2.xpose.msra.mxu0 0.0
        %838 = vmatprep.subr.mxu0 0.0
        %839 = vmatpush2.xpose.msra.mxu0 0.0
        %840 = vmatprep.subr.mxu0 0.0
        %841 = vmatpush2.xpose.msra.mxu0 0.0
        %842 = vmatprep.subr.mxu0 0.0
        %843 = vmatpush2.xpose.msra.mxu0 0.0
        %844 = vmatprep.subr.mxu0 0.0
        %845 = vmatpush2.xpose.msra.mxu0 0.0
        %846 = vmatprep.subr.mxu0 0.0
        %847 = vmatpush2.xpose.msra.mxu0 0.0
        %848 = vmatprep.subr.mxu0 0.0
        %849 = vmatpush2.xpose.msra.mxu0 0.0
        %850 = vmatprep.subr.mxu0 0.0
        %851 = vmatpush2.xpose.msra.mxu0 0.0
        %852 = vmatprep.subr.mxu0 0.0
        %853 = vmatpush2.xpose.msra.mxu0 0.0
        %854 = vmatprep.subr.mxu0 0.0
        %855 = vmatpush2.xpose.msra.mxu0 0.0
        %856 = vmatprep.subr.mxu0 0.0
        %857 = vmatpush2.xpose.msra.mxu0 0.0
        %858 = vmatprep.mubr.f32.mxu0 0.0
        %859 = vmatmul.mubr.f32.gmra.mxu0 %v790
        %v860 = vpop.f32.mrf.mxu0
        %v861 = vadd.f32 0.0, %v860
        %v862 = vpop.f32.mrf.mxu0
        %863 = vdwg.mxu0
        %v864 = vsel %vm580, %v861, -inf
        %865 = vmax.xlane.f32.xlu0 %v864
        %v866 = vpop.xlane.xlu0 %865
        %v867 = vsub.f32 %v861, %v866
        %v868 = vmul.f32 %v867, 1.442695
        %v869 = vpow.pop %v868
        %v870 = vsel %vm580, %v869, 0.0
        %871 = vadd.xlane.f32.xlu0 %v870
        %v872 = vpop.xlane.xlu0 %871
        %v873 = vrcp.pop %v872
        %v874 = vmul.f32 %v869, %v873
        %v875 = vrot.slane %v517, 1
        %v876 = vsel %vm538, %v518, %v875
        %v877 = vrot.slane %v519, 7
        %v878 = vsel %vm541, %v877, %v876
        %v879 = vrot.slane %v520, 6
        %v880 = vsel %vm544, %v879, %v878
        %v881 = vrot.slane %v521, 5
        %v882 = vsel %vm547, %v881, %v880
        %v883 = vrot.slane %v522, 4
        %v884 = vsel %vm550, %v883, %v882
        %v885 = vrot.slane %v523, 3
        %v886 = vsel %vm553, %v885, %v884
        %v887 = vrot.slane %v524, 2
        %v888 = vsel %vm556, %v887, %v886
        %v891 = vsel %vm580, %v874, 0
        %893 = vmatprep.subr.mxu0 0.0
        %894 = vmatpush1.msra.mxu0 0.0
        %895 = vmatprep.subr.mxu0 0.0
        %896 = vmatpush1.msra.mxu0 0.0
        %897 = vmatprep.subr.mxu0 0.0
        %898 = vmatpush1.msra.mxu0 0.0
        %899 = vmatprep.subr.mxu0 0.0
        %900 = vmatpush1.msra.mxu0 0.0
        %901 = vmatprep.subr.mxu0 0.0
        %902 = vmatpush1.msra.mxu0 0.0
        %903 = vmatprep.subr.mxu0 0.0
        %904 = vmatpush1.msra.mxu0 0.0
        %905 = vmatprep.subr.mxu0 0.0
        %906 = vmatpush1.msra.mxu0 0.0
        %907 = vmatprep.subr.mxu0 0.0
        %908 = vmatpush1.msra.mxu0 0.0
        %909 = vmatprep.subr.mxu0 0.0
        %910 = vmatpush1.msra.mxu0 0.0
        %911 = vmatprep.subr.mxu0 0.0
        %912 = vmatpush1.msra.mxu0 0.0
        %913 = vmatprep.subr.mxu0 0.0
        %914 = vmatpush1.msra.mxu0 0.0
        %915 = vmatprep.subr.mxu0 0.0
        %916 = vmatpush1.msra.mxu0 0.0
        %917 = vmatprep.subr.mxu0 0.0
        %918 = vmatpush1.msra.mxu0 0.0
        %919 = vmatprep.subr.mxu0 0.0
        %920 = vmatpush1.msra.mxu0 0.0
        %921 = vmatprep.subr.mxu0 0.0
        %922 = vmatpush1.msra.mxu0 0.0
        %923 = vmatprep.subr.mxu0 0.0
        %924 = vmatpush1.msra.mxu0 %v888
        %925 = vmatprep.subr.mxu0 0.0
        %926 = vmatpush2.msra.mxu0 0.0
        %927 = vmatprep.subr.mxu0 0.0
        %928 = vmatpush2.msra.mxu0 0.0
        %929 = vmatprep.subr.mxu0 0.0
        %930 = vmatpush2.msra.mxu0 0.0
        %931 = vmatprep.subr.mxu0 0.0
        %932 = vmatpush2.msra.mxu0 0.0
        %933 = vmatprep.subr.mxu0 0.0
        %934 = vmatpush2.msra.mxu0 0.0
        %935 = vmatprep.subr.mxu0 0.0
        %936 = vmatpush2.msra.mxu0 0.0
        %937 = vmatprep.subr.mxu0 0.0
        %938 = vmatpush2.msra.mxu0 0.0
        %939 = vmatprep.subr.mxu0 0.0
        %940 = vmatpush2.msra.mxu0 0.0
        %941 = vmatprep.subr.mxu0 0.0
        %942 = vmatpush2.msra.mxu0 0.0
        %943 = vmatprep.subr.mxu0 0.0
        %944 = vmatpush2.msra.mxu0 0.0
        %945 = vmatprep.subr.mxu0 0.0
        %946 = vmatpush2.msra.mxu0 0.0
        %947 = vmatprep.subr.mxu0 0.0
        %948 = vmatpush2.msra.mxu0 0.0
        %949 = vmatprep.subr.mxu0 0.0
        %950 = vmatpush2.msra.mxu0 0.0
        %951 = vmatprep.subr.mxu0 0.0
        %952 = vmatpush2.msra.mxu0 0.0
        %953 = vmatprep.subr.mxu0 0.0
        %954 = vmatpush2.msra.mxu0 0.0
        %955 = vmatprep.subr.mxu0 0.0
        %956 = vmatpush2.msra.mxu0 0.0
        %957 = vmatprep.mubr.f32.mxu0 0.0
        %958 = vmatmul.mubr.f32.gmra.mxu0 %v891
        %v959 = vpop.f32.mrf.mxu0
        %v960 = vadd.f32 0.0, %v959
        %v961 = vpop.f32.mrf.mxu0
        %962 = vdwg.mxu0
        %967 = vrot.lane.b32.xlu0 %v525, 120
        %v968 = vpop.permute.xlu0 %967
        %969 = vrot.lane.b32.xlu0 %v526, 120
        %v970 = vpop.permute.xlu0 %969
        %971 = vrot.lane.b32.xlu0 %v527, 120
        %v972 = vpop.permute.xlu0 %971
        %973 = vrot.lane.b32.xlu0 %v528, 120
        %v974 = vpop.permute.xlu0 %973
        %v976 = vsel %vm580, %v960, 0
        %v978 = vsel %vm580, %v968, 0
        %v980 = vsel %vm580, %v970, 0
        %v982 = vsel %vm580, %v972, 0
        %v984 = vsel %vm580, %v974, 0
        %986 = vmatprep.subr.mxu0 0.0
        %987 = vmatpush1.xpose.msra.mxu0 0.0
        %988 = vmatprep.subr.mxu0 0.0
        %989 = vmatpush1.xpose.msra.mxu0 0.0
        %990 = vmatprep.subr.mxu0 0.0
        %991 = vmatpush1.xpose.msra.mxu0 0.0
        %992 = vmatprep.subr.mxu0 0.0
        %993 = vmatpush1.xpose.msra.mxu0 0.0
        %994 = vmatprep.subr.mxu0 0.0
        %995 = vmatpush1.xpose.msra.mxu0 0.0
        %996 = vmatprep.subr.mxu0 0.0
        %997 = vmatpush1.xpose.msra.mxu0 0.0
        %998 = vmatprep.subr.mxu0 0.0
        %999 = vmatpush1.xpose.msra.mxu0 0.0
        %1000 = vmatprep.subr.mxu0 0.0
        %1001 = vmatpush1.xpose.msra.mxu0 0.0
        %1002 = vmatprep.subr.mxu0 0.0
        %1003 = vmatpush1.xpose.msra.mxu0 0.0
        %1004 = vmatprep.subr.mxu0 0.0
        %1005 = vmatpush1.xpose.msra.mxu0 0.0
        %1006 = vmatprep.subr.mxu0 0.0
        %1007 = vmatpush1.xpose.msra.mxu0 0.0
        %1008 = vmatprep.subr.mxu0 0.0
        %1009 = vmatpush1.xpose.msra.mxu0 0.0
        %1010 = vmatprep.subr.mxu0 0.0
        %1011 = vmatpush1.xpose.msra.mxu0 %v984
        %1012 = vmatprep.subr.mxu0 0.0
        %1013 = vmatpush1.xpose.msra.mxu0 %v982
        %1014 = vmatprep.subr.mxu0 0.0
        %1015 = vmatpush1.xpose.msra.mxu0 %v980
        %1016 = vmatprep.subr.mxu0 0.0
        %1017 = vmatpush1.xpose.msra.mxu0 %v978
        %1018 = vmatprep.subr.mxu0 0.0
        %1019 = vmatpush2.xpose.msra.mxu0 0.0
        %1020 = vmatprep.subr.mxu0 0.0
        %1021 = vmatpush2.xpose.msra.mxu0 0.0
        %1022 = vmatprep.subr.mxu0 0.0
        %1023 = vmatpush2.xpose.msra.mxu0 0.0
        %1024 = vmatprep.subr.mxu0 0.0
        %1025 = vmatpush2.xpose.msra.mxu0 0.0
        %1026 = vmatprep.subr.mxu0 0.0
        %1027 = vmatpush2.xpose.msra.mxu0 0.0
        %1028 = vmatprep.subr.mxu0 0.0
        %1029 = vmatpush2.xpose.msra.mxu0 0.0
        %1030 = vmatprep.subr.mxu0 0.0
        %1031 = vmatpush2.xpose.msra.mxu0 0.0
        %1032 = vmatprep.subr.mxu0 0.0
        %1033 = vmatpush2.xpose.msra.mxu0 0.0
        %1034 = vmatprep.subr.mxu0 0.0
        %1035 = vmatpush2.xpose.msra.mxu0 0.0
        %1036 = vmatprep.subr.mxu0 0.0
        %1037 = vmatpush2.xpose.msra.mxu0 0.0
        %1038 = vmatprep.subr.mxu0 0.0
        %1039 = vmatpush2.xpose.msra.mxu0 0.0
        %1040 = vmatprep.subr.mxu0 0.0
        %1041 = vmatpush2.xpose.msra.mxu0 0.0
        %1042 = vmatprep.subr.mxu0 0.0
        %1043 = vmatpush2.xpose.msra.mxu0 0.0
        %1044 = vmatprep.subr.mxu0 0.0
        %1045 = vmatpush2.xpose.msra.mxu0 0.0
        %1046 = vmatprep.subr.mxu0 0.0
        %1047 = vmatpush2.xpose.msra.mxu0 0.0
        %1048 = vmatprep.subr.mxu0 0.0
        %1049 = vmatpush2.xpose.msra.mxu0 0.0
        %1050 = vmatprep.mubr.f32.mxu0 0.0
        %1051 = vmatmul.mubr.f32.gmra.mxu0 %v976
        %v1052 = vpop.f32.mrf.mxu0
        %v1053 = vadd.f32 0.0, %v1052
        %v1054 = vpop.f32.mrf.mxu0
        %1055 = vdwg.mxu0
        %v1057 = vsel %vm580, %v759, 0
        %v1059 = vsel %vm580, %v525, 0
        %v1061 = vsel %vm580, %v526, 0
        %v1063 = vsel %vm580, %v527, 0
        %v1065 = vsel %vm580, %v528, 0
        %1067 = vmatprep.subr.mxu0 0.0
        %1068 = vmatpush1.xpose.msra.mxu0 0.0
        %1069 = vmatprep.subr.mxu0 0.0
        %1070 = vmatpush1.xpose.msra.mxu0 0.0
        %1071 = vmatprep.subr.mxu0 0.0
        %1072 = vmatpush1.xpose.msra.mxu0 0.0
        %1073 = vmatprep.subr.mxu0 0.0
        %1074 = vmatpush1.xpose.msra.mxu0 0.0
        %1075 = vmatprep.subr.mxu0 0.0
        %1076 = vmatpush1.xpose.msra.mxu0 0.0
        %1077 = vmatprep.subr.mxu0 0.0
        %1078 = vmatpush1.xpose.msra.mxu0 0.0
        %1079 = vmatprep.subr.mxu0 0.0
        %1080 = vmatpush1.xpose.msra.mxu0 0.0
        %1081 = vmatprep.subr.mxu0 0.0
        %1082 = vmatpush1.xpose.msra.mxu0 0.0
        %1083 = vmatprep.subr.mxu0 0.0
        %1084 = vmatpush1.xpose.msra.mxu0 0.0
        %1085 = vmatprep.subr.mxu0 0.0
        %1086 = vmatpush1.xpose.msra.mxu0 0.0
        %1087 = vmatprep.subr.mxu0 0.0
        %1088 = vmatpush1.xpose.msra.mxu0 0.0
        %1089 = vmatprep.subr.mxu0 0.0
        %1090 = vmatpush1.xpose.msra.mxu0 0.0
        %1091 = vmatprep.subr.mxu0 0.0
        %1092 = vmatpush1.xpose.msra.mxu0 %v1065
        %1093 = vmatprep.subr.mxu0 0.0
        %1094 = vmatpush1.xpose.msra.mxu0 %v1063
        %1095 = vmatprep.subr.mxu0 0.0
        %1096 = vmatpush1.xpose.msra.mxu0 %v1061
        %1097 = vmatprep.subr.mxu0 0.0
        %1098 = vmatpush1.xpose.msra.mxu0 %v1059
        %1099 = vmatprep.subr.mxu0 0.0
        %1100 = vmatpush2.xpose.msra.mxu0 0.0
        %1101 = vmatprep.subr.mxu0 0.0
        %1102 = vmatpush2.xpose.msra.mxu0 0.0
        %1103 = vmatprep.subr.mxu0 0.0
        %1104 = vmatpush2.xpose.msra.mxu0 0.0
        %1105 = vmatprep.subr.mxu0 0.0
        %1106 = vmatpush2.xpose.msra.mxu0 0.0
        %1107 = vmatprep.subr.mxu0 0.0
        %1108 = vmatpush2.xpose.msra.mxu0 0.0
        %1109 = vmatprep.subr.mxu0 0.0
        %1110 = vmatpush2.xpose.msra.mxu0 0.0
        %1111 = vmatprep.subr.mxu0 0.0
        %1112 = vmatpush2.xpose.msra.mxu0 0.0
        %1113 = vmatprep.subr.mxu0 0.0
        %1114 = vmatpush2.xpose.msra.mxu0 0.0
        %1115 = vmatprep.subr.mxu0 0.0
        %1116 = vmatpush2.xpose.msra.mxu0 0.0
        %1117 = vmatprep.subr.mxu0 0.0
        %1118 = vmatpush2.xpose.msra.mxu0 0.0
        %1119 = vmatprep.subr.mxu0 0.0
        %1120 = vmatpush2.xpose.msra.mxu0 0.0
        %1121 = vmatprep.subr.mxu0 0.0
        %1122 = vmatpush2.xpose.msra.mxu0 0.0
        %1123 = vmatprep.subr.mxu0 0.0
        %1124 = vmatpush2.xpose.msra.mxu0 0.0
        %1125 = vmatprep.subr.mxu0 0.0
        %1126 = vmatpush2.xpose.msra.mxu0 0.0
        %1127 = vmatprep.subr.mxu0 0.0
        %1128 = vmatpush2.xpose.msra.mxu0 0.0
        %1129 = vmatprep.subr.mxu0 0.0
        %1130 = vmatpush2.xpose.msra.mxu0 0.0
        %1131 = vmatprep.mubr.f32.mxu0 0.0
        %1132 = vmatmul.mubr.f32.gmra.mxu0 %v1057
        %v1133 = vpop.f32.mrf.mxu0
        %v1134 = vadd.f32 %v1053, %v1133
        %v1135 = vpop.f32.mrf.mxu0
        %1136 = vdwg.mxu0
        %v1137 = vrot.slane %v501, 2
        %v1138 = vrot.slane %v502, 1
        %v1139 = vsel %vm538, %v1138, %v1137
        %v1140 = vsel %vm541, %v503, %v1139
        %v1141 = vrot.slane %v504, 7
        %v1142 = vsel %vm544, %v1141, %v1140
        %v1143 = vrot.slane %v505, 6
        %v1144 = vsel %vm547, %v1143, %v1142
        %v1145 = vrot.slane %v506, 5
        %v1146 = vsel %vm550, %v1145, %v1144
        %v1147 = vrot.slane %v507, 4
        %v1148 = vsel %vm553, %v1147, %v1146
        %v1149 = vrot.slane %v508, 3
        %v1150 = vsel %vm556, %v1149, %v1148
        %v1151 = vrot.slane %v509, 2
        %v1152 = vrot.slane %v510, 1
        %v1153 = vsel %vm538, %v1152, %v1151
        %v1154 = vsel %vm541, %v511, %v1153
        %v1155 = vrot.slane %v512, 7
        %v1156 = vsel %vm544, %v1155, %v1154
        %v1157 = vrot.slane %v513, 6
        %v1158 = vsel %vm547, %v1157, %v1156
        %v1159 = vrot.slane %v514, 5
        %v1160 = vsel %vm550, %v1159, %v1158
        %v1161 = vrot.slane %v515, 4
        %v1162 = vsel %vm553, %v1161, %v1160
        %v1163 = vrot.slane %v516, 3
        %v1164 = vsel %vm556, %v1163, %v1162
        %v1165 = vsel %vm580, %v1150, 0
        %v1167 = vsel %vm580, %v1164, 0
        %1169 = vmatprep.subr.mxu0 0.0
        %1170 = vmatpush1.xpose.msra.mxu0 0.0
        %1171 = vmatprep.subr.mxu0 0.0
        %1172 = vmatpush1.xpose.msra.mxu0 0.0
        %1173 = vmatprep.subr.mxu0 0.0
        %1174 = vmatpush1.xpose.msra.mxu0 0.0
        %1175 = vmatprep.subr.mxu0 0.0
        %1176 = vmatpush1.xpose.msra.mxu0 0.0
        %1177 = vmatprep.subr.mxu0 0.0
        %1178 = vmatpush1.xpose.msra.mxu0 0.0
        %1179 = vmatprep.subr.mxu0 0.0
        %1180 = vmatpush1.xpose.msra.mxu0 0.0
        %1181 = vmatprep.subr.mxu0 0.0
        %1182 = vmatpush1.xpose.msra.mxu0 0.0
        %1183 = vmatprep.subr.mxu0 0.0
        %1184 = vmatpush1.xpose.msra.mxu0 0.0
        %1185 = vmatprep.subr.mxu0 0.0
        %1186 = vmatpush1.xpose.msra.mxu0 0.0
        %1187 = vmatprep.subr.mxu0 0.0
        %1188 = vmatpush1.xpose.msra.mxu0 0.0
        %1189 = vmatprep.subr.mxu0 0.0
        %1190 = vmatpush1.xpose.msra.mxu0 0.0
        %1191 = vmatprep.subr.mxu0 0.0
        %1192 = vmatpush1.xpose.msra.mxu0 0.0
        %1193 = vmatprep.subr.mxu0 0.0
        %1194 = vmatpush1.xpose.msra.mxu0 0.0
        %1195 = vmatprep.subr.mxu0 0.0
        %1196 = vmatpush1.xpose.msra.mxu0 0.0
        %1197 = vmatprep.subr.mxu0 0.0
        %1198 = vmatpush1.xpose.msra.mxu0 0.0
        %1199 = vmatprep.subr.mxu0 0.0
        %1200 = vmatpush1.xpose.msra.mxu0 %v1167
        %1201 = vmatprep.subr.mxu0 0.0
        %1202 = vmatpush2.xpose.msra.mxu0 0.0
        %1203 = vmatprep.subr.mxu0 0.0
        %1204 = vmatpush2.xpose.msra.mxu0 0.0
        %1205 = vmatprep.subr.mxu0 0.0
        %1206 = vmatpush2.xpose.msra.mxu0 0.0
        %1207 = vmatprep.subr.mxu0 0.0
        %1208 = vmatpush2.xpose.msra.mxu0 0.0
        %1209 = vmatprep.subr.mxu0 0.0
        %1210 = vmatpush2.xpose.msra.mxu0 0.0
        %1211 = vmatprep.subr.mxu0 0.0
        %1212 = vmatpush2.xpose.msra.mxu0 0.0
        %1213 = vmatprep.subr.mxu0 0.0
        %1214 = vmatpush2.xpose.msra.mxu0 0.0
        %1215 = vmatprep.subr.mxu0 0.0
        %1216 = vmatpush2.xpose.msra.mxu0 0.0
        %1217 = vmatprep.subr.mxu0 0.0
        %1218 = vmatpush2.xpose.msra.mxu0 0.0
        %1219 = vmatprep.subr.mxu0 0.0
        %1220 = vmatpush2.xpose.msra.mxu0 0.0
        %1221 = vmatprep.subr.mxu0 0.0
        %1222 = vmatpush2.xpose.msra.mxu0 0.0
        %1223 = vmatprep.subr.mxu0 0.0
        %1224 = vmatpush2.xpose.msra.mxu0 0.0
        %1225 = vmatprep.subr.mxu0 0.0
        %1226 = vmatpush2.xpose.msra.mxu0 0.0
        %1227 = vmatprep.subr.mxu0 0.0
        %1228 = vmatpush2.xpose.msra.mxu0 0.0
        %1229 = vmatprep.subr.mxu0 0.0
        %1230 = vmatpush2.xpose.msra.mxu0 0.0
        %1231 = vmatprep.subr.mxu0 0.0
        %1232 = vmatpush2.xpose.msra.mxu0 0.0
        %1233 = vmatprep.mubr.f32.mxu0 0.0
        %1234 = vmatmul.mubr.f32.gmra.mxu0 %v1165
        %v1235 = vpop.f32.mrf.mxu0
        %v1236 = vadd.f32 0.0, %v1235
        %v1237 = vpop.f32.mrf.mxu0
        %1238 = vdwg.mxu0
        %v1239 = vsel %vm580, %v1236, -inf
        %1240 = vmax.xlane.f32.xlu0 %v1239
        %v1241 = vpop.xlane.xlu0 %1240
        %v1242 = vsub.f32 %v1236, %v1241
        %v1243 = vmul.f32 %v1242, 1.442695
        %v1244 = vpow.pop %v1243
        %v1245 = vsel %vm580, %v1244, 0.0
        %1246 = vadd.xlane.f32.xlu0 %v1245
        %v1247 = vpop.xlane.xlu0 %1246
        %v1248 = vrcp.pop %v1247
        %v1249 = vmul.f32 %v1244, %v1248
        %v1250 = vrot.slane %v517, 2
        %v1251 = vrot.slane %v518, 1
        %v1252 = vsel %vm538, %v1251, %v1250
        %v1253 = vsel %vm541, %v519, %v1252
        %v1254 = vrot.slane %v520, 7
        %v1255 = vsel %vm544, %v1254, %v1253
        %v1256 = vrot.slane %v521, 6
        %v1257 = vsel %vm547, %v1256, %v1255
        %v1258 = vrot.slane %v522, 5
        %v1259 = vsel %vm550, %v1258, %v1257
        %v1260 = vrot.slane %v523, 4
        %v1261 = vsel %vm553, %v1260, %v1259
        %v1262 = vrot.slane %v524, 3
        %v1263 = vsel %vm556, %v1262, %v1261
        %v1266 = vsel %vm580, %v1249, 0
        %1268 = vmatprep.subr.mxu0 0.0
        %1269 = vmatpush1.msra.mxu0 0.0
        %1270 = vmatprep.subr.mxu0 0.0
        %1271 = vmatpush1.msra.mxu0 0.0
        %1272 = vmatprep.subr.mxu0 0.0
        %1273 = vmatpush1.msra.mxu0 0.0
        %1274 = vmatprep.subr.mxu0 0.0
        %1275 = vmatpush1.msra.mxu0 0.0
        %1276 = vmatprep.subr.mxu0 0.0
        %1277 = vmatpush1.msra.mxu0 0.0
        %1278 = vmatprep.subr.mxu0 0.0
        %1279 = vmatpush1.msra.mxu0 0.0
        %1280 = vmatprep.subr.mxu0 0.0
        %1281 = vmatpush1.msra.mxu0 0.0
        %1282 = vmatprep.subr.mxu0 0.0
        %1283 = vmatpush1.msra.mxu0 0.0
        %1284 = vmatprep.subr.mxu0 0.0
        %1285 = vmatpush1.msra.mxu0 0.0
        %1286 = vmatprep.subr.mxu0 0.0
        %1287 = vmatpush1.msra.mxu0 0.0
        %1288 = vmatprep.subr.mxu0 0.0
        %1289 = vmatpush1.msra.mxu0 0.0
        %1290 = vmatprep.subr.mxu0 0.0
        %1291 = vmatpush1.msra.mxu0 0.0
        %1292 = vmatprep.subr.mxu0 0.0
        %1293 = vmatpush1.msra.mxu0 0.0
        %1294 = vmatprep.subr.mxu0 0.0
        %1295 = vmatpush1.msra.mxu0 0.0
        %1296 = vmatprep.subr.mxu0 0.0
        %1297 = vmatpush1.msra.mxu0 0.0
        %1298 = vmatprep.subr.mxu0 0.0
        %1299 = vmatpush1.msra.mxu0 %v1263
        %1300 = vmatprep.subr.mxu0 0.0
        %1301 = vmatpush2.msra.mxu0 0.0
        %1302 = vmatprep.subr.mxu0 0.0
        %1303 = vmatpush2.msra.mxu0 0.0
        %1304 = vmatprep.subr.mxu0 0.0
        %1305 = vmatpush2.msra.mxu0 0.0
        %1306 = vmatprep.subr.mxu0 0.0
        %1307 = vmatpush2.msra.mxu0 0.0
        %1308 = vmatprep.subr.mxu0 0.0
        %1309 = vmatpush2.msra.mxu0 0.0
        %1310 = vmatprep.subr.mxu0 0.0
        %1311 = vmatpush2.msra.mxu0 0.0
        %1312 = vmatprep.subr.mxu0 0.0
        %1313 = vmatpush2.msra.mxu0 0.0
        %1314 = vmatprep.subr.mxu0 0.0
        %1315 = vmatpush2.msra.mxu0 0.0
        %1316 = vmatprep.subr.mxu0 0.0
        %1317 = vmatpush2.msra.mxu0 0.0
        %1318 = vmatprep.subr.mxu0 0.0
        %1319 = vmatpush2.msra.mxu0 0.0
        %1320 = vmatprep.subr.mxu0 0.0
        %1321 = vmatpush2.msra.mxu0 0.0
        %1322 = vmatprep.subr.mxu0 0.0
        %1323 = vmatpush2.msra.mxu0 0.0
        %1324 = vmatprep.subr.mxu0 0.0
        %1325 = vmatpush2.msra.mxu0 0.0
        %1326 = vmatprep.subr.mxu0 0.0
        %1327 = vmatpush2.msra.mxu0 0.0
        %1328 = vmatprep.subr.mxu0 0.0
        %1329 = vmatpush2.msra.mxu0 0.0
        %1330 = vmatprep.subr.mxu0 0.0
        %1331 = vmatpush2.msra.mxu0 0.0
        %1332 = vmatprep.mubr.f32.mxu0 0.0
        %1333 = vmatmul.mubr.f32.gmra.mxu0 %v1266
        %v1334 = vpop.f32.mrf.mxu0
        %v1335 = vadd.f32 0.0, %v1334
        %v1336 = vpop.f32.mrf.mxu0
        %1337 = vdwg.mxu0
        %1338 = vrot.lane.b32.xlu0 %v525, 112
        %v1339 = vpop.permute.xlu0 %1338
        %1340 = vrot.lane.b32.xlu0 %v526, 112
        %v1341 = vpop.permute.xlu0 %1340
        %1342 = vrot.lane.b32.xlu0 %v527, 112
        %v1343 = vpop.permute.xlu0 %1342
        %1344 = vrot.lane.b32.xlu0 %v528, 112
        %v1345 = vpop.permute.xlu0 %1344
        %v1347 = vsel %vm580, %v1335, 0
        %v1349 = vsel %vm580, %v1339, 0
        %v1351 = vsel %vm580, %v1341, 0
        %v1353 = vsel %vm580, %v1343, 0
        %v1355 = vsel %vm580, %v1345, 0
        %1357 = vmatprep.subr.mxu0 0.0
        %1358 = vmatpush1.xpose.msra.mxu0 0.0
        %1359 = vmatprep.subr.mxu0 0.0
        %1360 = vmatpush1.xpose.msra.mxu0 0.0
        %1361 = vmatprep.subr.mxu0 0.0
        %1362 = vmatpush1.xpose.msra.mxu0 0.0
        %1363 = vmatprep.subr.mxu0 0.0
        %1364 = vmatpush1.xpose.msra.mxu0 0.0
        %1365 = vmatprep.subr.mxu0 0.0
        %1366 = vmatpush1.xpose.msra.mxu0 0.0
        %1367 = vmatprep.subr.mxu0 0.0
        %1368 = vmatpush1.xpose.msra.mxu0 0.0
        %1369 = vmatprep.subr.mxu0 0.0
        %1370 = vmatpush1.xpose.msra.mxu0 0.0
        %1371 = vmatprep.subr.mxu0 0.0
        %1372 = vmatpush1.xpose.msra.mxu0 0.0
        %1373 = vmatprep.subr.mxu0 0.0
        %1374 = vmatpush1.xpose.msra.mxu0 0.0
        %1375 = vmatprep.subr.mxu0 0.0
        %1376 = vmatpush1.xpose.msra.mxu0 0.0
        %1377 = vmatprep.subr.mxu0 0.0
        %1378 = vmatpush1.xpose.msra.mxu0 0.0
        %1379 = vmatprep.subr.mxu0 0.0
        %1380 = vmatpush1.xpose.msra.mxu0 0.0
        %1381 = vmatprep.subr.mxu0 0.0
        %1382 = vmatpush1.xpose.msra.mxu0 %v1355
        %1383 = vmatprep.subr.mxu0 0.0
        %1384 = vmatpush1.xpose.msra.mxu0 %v1353
        %1385 = vmatprep.subr.mxu0 0.0
        %1386 = vmatpush1.xpose.msra.mxu0 %v1351
        %1387 = vmatprep.subr.mxu0 0.0
        %1388 = vmatpush1.xpose.msra.mxu0 %v1349
        %1389 = vmatprep.subr.mxu0 0.0
        %1390 = vmatpush2.xpose.msra.mxu0 0.0
        %1391 = vmatprep.subr.mxu0 0.0
        %1392 = vmatpush2.xpose.msra.mxu0 0.0
        %1393 = vmatprep.subr.mxu0 0.0
        %1394 = vmatpush2.xpose.msra.mxu0 0.0
        %1395 = vmatprep.subr.mxu0 0.0
        %1396 = vmatpush2.xpose.msra.mxu0 0.0
        %1397 = vmatprep.subr.mxu0 0.0
        %1398 = vmatpush2.xpose.msra.mxu0 0.0
        %1399 = vmatprep.subr.mxu0 0.0
        %1400 = vmatpush2.xpose.msra.mxu0 0.0
        %1401 = vmatprep.subr.mxu0 0.0
        %1402 = vmatpush2.xpose.msra.mxu0 0.0
        %1403 = vmatprep.subr.mxu0 0.0
        %1404 = vmatpush2.xpose.msra.mxu0 0.0
        %1405 = vmatprep.subr.mxu0 0.0
        %1406 = vmatpush2.xpose.msra.mxu0 0.0
        %1407 = vmatprep.subr.mxu0 0.0
        %1408 = vmatpush2.xpose.msra.mxu0 0.0
        %1409 = vmatprep.subr.mxu0 0.0
        %1410 = vmatpush2.xpose.msra.mxu0 0.0
        %1411 = vmatprep.subr.mxu0 0.0
        %1412 = vmatpush2.xpose.msra.mxu0 0.0
        %1413 = vmatprep.subr.mxu0 0.0
        %1414 = vmatpush2.xpose.msra.mxu0 0.0
        %1415 = vmatprep.subr.mxu0 0.0
        %1416 = vmatpush2.xpose.msra.mxu0 0.0
        %1417 = vmatprep.subr.mxu0 0.0
        %1418 = vmatpush2.xpose.msra.mxu0 0.0
        %1419 = vmatprep.subr.mxu0 0.0
        %1420 = vmatpush2.xpose.msra.mxu0 0.0
        %1421 = vmatprep.mubr.f32.mxu0 0.0
        %1422 = vmatmul.mubr.f32.gmra.mxu0 %v1347
        %v1423 = vpop.f32.mrf.mxu0
        %v1424 = vadd.f32 0.0, %v1423
        %v1425 = vpop.f32.mrf.mxu0
        %1426 = vdwg.mxu0
        %v1427 = vadd.f32 %v1134, %v1424
        %v1428 = vrot.slane %v501, 3
        %v1429 = vrot.slane %v502, 2
        %v1430 = vsel %vm538, %v1429, %v1428
        %v1431 = vrot.slane %v503, 1
        %v1432 = vsel %vm541, %v1431, %v1430
        %v1433 = vsel %vm544, %v504, %v1432
        %v1434 = vrot.slane %v505, 7
        %v1435 = vsel %vm547, %v1434, %v1433
        %v1436 = vrot.slane %v506, 6
        %v1437 = vsel %vm550, %v1436, %v1435
        %v1438 = vrot.slane %v507, 5
        %v1439 = vsel %vm553, %v1438, %v1437
        %v1440 = vrot.slane %v508, 4
        %v1441 = vsel %vm556, %v1440, %v1439
        %v1442 = vrot.slane %v509, 3
        %v1443 = vrot.slane %v510, 2
        %v1444 = vsel %vm538, %v1443, %v1442
        %v1445 = vrot.slane %v511, 1
        %v1446 = vsel %vm541, %v1445, %v1444
        %v1447 = vsel %vm544, %v512, %v1446
        %v1448 = vrot.slane %v513, 7
        %v1449 = vsel %vm547, %v1448, %v1447
        %v1450 = vrot.slane %v514, 6
        %v1451 = vsel %vm550, %v1450, %v1449
        %v1452 = vrot.slane %v515, 5
        %v1453 = vsel %vm553, %v1452, %v1451
        %v1454 = vrot.slane %v516, 4
        %v1455 = vsel %vm556, %v1454, %v1453
        %v1456 = vsel %vm580, %v1441, 0
        %v1458 = vsel %vm580, %v1455, 0
        %1460 = vmatprep.subr.mxu0 0.0
        %1461 = vmatpush1.xpose.msra.mxu0 0.0
        %1462 = vmatprep.subr.mxu0 0.0
        %1463 = vmatpush1.xpose.msra.mxu0 0.0
        %1464 = vmatprep.subr.mxu0 0.0
        %1465 = vmatpush1.xpose.msra.mxu0 0.0
        %1466 = vmatprep.subr.mxu0 0.0
        %1467 = vmatpush1.xpose.msra.mxu0 0.0
        %1468 = vmatprep.subr.mxu0 0.0
        %1469 = vmatpush1.xpose.msra.mxu0 0.0
        %1470 = vmatprep.subr.mxu0 0.0
        %1471 = vmatpush1.xpose.msra.mxu0 0.0
        %1472 = vmatprep.subr.mxu0 0.0
        %1473 = vmatpush1.xpose.msra.mxu0 0.0
        %1474 = vmatprep.subr.mxu0 0.0
        %1475 = vmatpush1.xpose.msra.mxu0 0.0
        %1476 = vmatprep.subr.mxu0 0.0
        %1477 = vmatpush1.xpose.msra.mxu0 0.0
        %1478 = vmatprep.subr.mxu0 0.0
        %1479 = vmatpush1.xpose.msra.mxu0 0.0
        %1480 = vmatprep.subr.mxu0 0.0
        %1481 = vmatpush1.xpose.msra.mxu0 0.0
        %1482 = vmatprep.subr.mxu0 0.0
        %1483 = vmatpush1.xpose.msra.mxu0 0.0
        %1484 = vmatprep.subr.mxu0 0.0
        %1485 = vmatpush1.xpose.msra.mxu0 0.0
        %1486 = vmatprep.subr.mxu0 0.0
        %1487 = vmatpush1.xpose.msra.mxu0 0.0
        %1488 = vmatprep.subr.mxu0 0.0
        %1489 = vmatpush1.xpose.msra.mxu0 0.0
        %1490 = vmatprep.subr.mxu0 0.0
        %1491 = vmatpush1.xpose.msra.mxu0 %v1458
        %1492 = vmatprep.subr.mxu0 0.0
        %1493 = vmatpush2.xpose.msra.mxu0 0.0
        %1494 = vmatprep.subr.mxu0 0.0
        %1495 = vmatpush2.xpose.msra.mxu0 0.0
        %1496 = vmatprep.subr.mxu0 0.0
        %1497 = vmatpush2.xpose.msra.mxu0 0.0
        %1498 = vmatprep.subr.mxu0 0.0
        %1499 = vmatpush2.xpose.msra.mxu0 0.0
        %1500 = vmatprep.subr.mxu0 0.0
        %1501 = vmatpush2.xpose.msra.mxu0 0.0
        %1502 = vmatprep.subr.mxu0 0.0
        %1503 = vmatpush2.xpose.msra.mxu0 0.0
        %1504 = vmatprep.subr.mxu0 0.0
        %1505 = vmatpush2.xpose.msra.mxu0 0.0
        %1506 = vmatprep.subr.mxu0 0.0
        %1507 = vmatpush2.xpose.msra.mxu0 0.0
        %1508 = vmatprep.subr.mxu0 0.0
        %1509 = vmatpush2.xpose.msra.mxu0 0.0
        %1510 = vmatprep.subr.mxu0 0.0
        %1511 = vmatpush2.xpose.msra.mxu0 0.0
        %1512 = vmatprep.subr.mxu0 0.0
        %1513 = vmatpush2.xpose.msra.mxu0 0.0
        %1514 = vmatprep.subr.mxu0 0.0
        %1515 = vmatpush2.xpose.msra.mxu0 0.0
        %1516 = vmatprep.subr.mxu0 0.0
        %1517 = vmatpush2.xpose.msra.mxu0 0.0
        %1518 = vmatprep.subr.mxu0 0.0
        %1519 = vmatpush2.xpose.msra.mxu0 0.0
        %1520 = vmatprep.subr.mxu0 0.0
        %1521 = vmatpush2.xpose.msra.mxu0 0.0
        %1522 = vmatprep.subr.mxu0 0.0
        %1523 = vmatpush2.xpose.msra.mxu0 0.0
        %1524 = vmatprep.mubr.f32.mxu0 0.0
        %1525 = vmatmul.mubr.f32.gmra.mxu0 %v1456
        %v1526 = vpop.f32.mrf.mxu0
        %v1527 = vadd.f32 0.0, %v1526
        %v1528 = vpop.f32.mrf.mxu0
        %1529 = vdwg.mxu0
        %v1530 = vsel %vm580, %v1527, -inf
        %1531 = vmax.xlane.f32.xlu0 %v1530
        %v1532 = vpop.xlane.xlu0 %1531
        %v1533 = vsub.f32 %v1527, %v1532
        %v1534 = vmul.f32 %v1533, 1.442695
        %v1535 = vpow.pop %v1534
        %v1536 = vsel %vm580, %v1535, 0.0
        %1537 = vadd.xlane.f32.xlu0 %v1536
        %v1538 = vpop.xlane.xlu0 %1537
        %v1539 = vrcp.pop %v1538
        %v1540 = vmul.f32 %v1535, %v1539
        %v1541 = vrot.slane %v517, 3
        %v1542 = vrot.slane %v518, 2
        %v1543 = vsel %vm538, %v1542, %v1541
        %v1544 = vrot.slane %v519, 1
        %v1545 = vsel %vm541, %v1544, %v1543
        %v1546 = vsel %vm544, %v520, %v1545
        %v1547 = vrot.slane %v521, 7
        %v1548 = vsel %vm547, %v1547, %v1546
        %v1549 = vrot.slane %v522, 6
        %v1550 = vsel %vm550, %v1549, %v1548
        %v1551 = vrot.slane %v523, 5
        %v1552 = vsel %vm553, %v1551, %v1550
        %v1553 = vrot.slane %v524, 4
        %v1554 = vsel %vm556, %v1553, %v1552
        %v1557 = vsel %vm580, %v1540, 0
        %1559 = vmatprep.subr.mxu0 0.0
        %1560 = vmatpush1.msra.mxu0 0.0
        %1561 = vmatprep.subr.mxu0 0.0
        %1562 = vmatpush1.msra.mxu0 0.0
        %1563 = vmatprep.subr.mxu0 0.0
        %1564 = vmatpush1.msra.mxu0 0.0
        %1565 = vmatprep.subr.mxu0 0.0
        %1566 = vmatpush1.msra.mxu0 0.0
        %1567 = vmatprep.subr.mxu0 0.0
        %1568 = vmatpush1.msra.mxu0 0.0
        %1569 = vmatprep.subr.mxu0 0.0
        %1570 = vmatpush1.msra.mxu0 0.0
        %1571 = vmatprep.subr.mxu0 0.0
        %1572 = vmatpush1.msra.mxu0 0.0
        %1573 = vmatprep.subr.mxu0 0.0
        %1574 = vmatpush1.msra.mxu0 0.0
        %1575 = vmatprep.subr.mxu0 0.0
        %1576 = vmatpush1.msra.mxu0 0.0
        %1577 = vmatprep.subr.mxu0 0.0
        %1578 = vmatpush1.msra.mxu0 0.0
        %1579 = vmatprep.subr.mxu0 0.0
        %1580 = vmatpush1.msra.mxu0 0.0
        %1581 = vmatprep.subr.mxu0 0.0
        %1582 = vmatpush1.msra.mxu0 0.0
        %1583 = vmatprep.subr.mxu0 0.0
        %1584 = vmatpush1.msra.mxu0 0.0
        %1585 = vmatprep.subr.mxu0 0.0
        %1586 = vmatpush1.msra.mxu0 0.0
        %1587 = vmatprep.subr.mxu0 0.0
        %1588 = vmatpush1.msra.mxu0 0.0
        %1589 = vmatprep.subr.mxu0 0.0
        %1590 = vmatpush1.msra.mxu0 %v1554
        %1591 = vmatprep.subr.mxu0 0.0
        %1592 = vmatpush2.msra.mxu0 0.0
        %1593 = vmatprep.subr.mxu0 0.0
        %1594 = vmatpush2.msra.mxu0 0.0
        %1595 = vmatprep.subr.mxu0 0.0
        %1596 = vmatpush2.msra.mxu0 0.0
        %1597 = vmatprep.subr.mxu0 0.0
        %1598 = vmatpush2.msra.mxu0 0.0
        %1599 = vmatprep.subr.mxu0 0.0
        %1600 = vmatpush2.msra.mxu0 0.0
        %1601 = vmatprep.subr.mxu0 0.0
        %1602 = vmatpush2.msra.mxu0 0.0
        %1603 = vmatprep.subr.mxu0 0.0
        %1604 = vmatpush2.msra.mxu0 0.0
        %1605 = vmatprep.subr.mxu0 0.0
        %1606 = vmatpush2.msra.mxu0 0.0
        %1607 = vmatprep.subr.mxu0 0.0
        %1608 = vmatpush2.msra.mxu0 0.0
        %1609 = vmatprep.subr.mxu0 0.0
        %1610 = vmatpush2.msra.mxu0 0.0
        %1611 = vmatprep.subr.mxu0 0.0
        %1612 = vmatpush2.msra.mxu0 0.0
        %1613 = vmatprep.subr.mxu0 0.0
        %1614 = vmatpush2.msra.mxu0 0.0
        %1615 = vmatprep.subr.mxu0 0.0
        %1616 = vmatpush2.msra.mxu0 0.0
        %1617 = vmatprep.subr.mxu0 0.0
        %1618 = vmatpush2.msra.mxu0 0.0
        %1619 = vmatprep.subr.mxu0 0.0
        %1620 = vmatpush2.msra.mxu0 0.0
        %1621 = vmatprep.subr.mxu0 0.0
        %1622 = vmatpush2.msra.mxu0 0.0
        %1623 = vmatprep.mubr.f32.mxu0 0.0
        %1624 = vmatmul.mubr.f32.gmra.mxu0 %v1557
        %v1625 = vpop.f32.mrf.mxu0
        %v1626 = vadd.f32 0.0, %v1625
        %v1627 = vpop.f32.mrf.mxu0
        %1628 = vdwg.mxu0
        %1629 = vrot.lane.b32.xlu0 %v525, 104
        %v1630 = vpop.permute.xlu0 %1629
        %1631 = vrot.lane.b32.xlu0 %v526, 104
        %v1632 = vpop.permute.xlu0 %1631
        %1633 = vrot.lane.b32.xlu0 %v527, 104
        %v1634 = vpop.permute.xlu0 %1633
        %1635 = vrot.lane.b32.xlu0 %v528, 104
        %v1636 = vpop.permute.xlu0 %1635
        %v1638 = vsel %vm580, %v1626, 0
        %v1640 = vsel %vm580, %v1630, 0
        %v1642 = vsel %vm580, %v1632, 0
        %v1644 = vsel %vm580, %v1634, 0
        %v1646 = vsel %vm580, %v1636, 0
        %1648 = vmatprep.subr.mxu0 0.0
        %1649 = vmatpush1.xpose.msra.mxu0 0.0
        %1650 = vmatprep.subr.mxu0 0.0
        %1651 = vmatpush1.xpose.msra.mxu0 0.0
        %1652 = vmatprep.subr.mxu0 0.0
        %1653 = vmatpush1.xpose.msra.mxu0 0.0
        %1654 = vmatprep.subr.mxu0 0.0
        %1655 = vmatpush1.xpose.msra.mxu0 0.0
        %1656 = vmatprep.subr.mxu0 0.0
        %1657 = vmatpush1.xpose.msra.mxu0 0.0
        %1658 = vmatprep.subr.mxu0 0.0
        %1659 = vmatpush1.xpose.msra.mxu0 0.0
        %1660 = vmatprep.subr.mxu0 0.0
        %1661 = vmatpush1.xpose.msra.mxu0 0.0
        %1662 = vmatprep.subr.mxu0 0.0
        %1663 = vmatpush1.xpose.msra.mxu0 0.0
        %1664 = vmatprep.subr.mxu0 0.0
        %1665 = vmatpush1.xpose.msra.mxu0 0.0
        %1666 = vmatprep.subr.mxu0 0.0
        %1667 = vmatpush1.xpose.msra.mxu0 0.0
        %1668 = vmatprep.subr.mxu0 0.0
        %1669 = vmatpush1.xpose.msra.mxu0 0.0
        %1670 = vmatprep.subr.mxu0 0.0
        %1671 = vmatpush1.xpose.msra.mxu0 0.0
        %1672 = vmatprep.subr.mxu0 0.0
        %1673 = vmatpush1.xpose.msra.mxu0 %v1646
        %1674 = vmatprep.subr.mxu0 0.0
        %1675 = vmatpush1.xpose.msra.mxu0 %v1644
        %1676 = vmatprep.subr.mxu0 0.0
        %1677 = vmatpush1.xpose.msra.mxu0 %v1642
        %1678 = vmatprep.subr.mxu0 0.0
        %1679 = vmatpush1.xpose.msra.mxu0 %v1640
        %1680 = vmatprep.subr.mxu0 0.0
        %1681 = vmatpush2.xpose.msra.mxu0 0.0
        %1682 = vmatprep.subr.mxu0 0.0
        %1683 = vmatpush2.xpose.msra.mxu0 0.0
        %1684 = vmatprep.subr.mxu0 0.0
        %1685 = vmatpush2.xpose.msra.mxu0 0.0
        %1686 = vmatprep.subr.mxu0 0.0
        %1687 = vmatpush2.xpose.msra.mxu0 0.0
        %1688 = vmatprep.subr.mxu0 0.0
        %1689 = vmatpush2.xpose.msra.mxu0 0.0
        %1690 = vmatprep.subr.mxu0 0.0
        %1691 = vmatpush2.xpose.msra.mxu0 0.0
        %1692 = vmatprep.subr.mxu0 0.0
        %1693 = vmatpush2.xpose.msra.mxu0 0.0
        %1694 = vmatprep.subr.mxu0 0.0
        %1695 = vmatpush2.xpose.msra.mxu0 0.0
        %1696 = vmatprep.subr.mxu0 0.0
        %1697 = vmatpush2.xpose.msra.mxu0 0.0
        %1698 = vmatprep.subr.mxu0 0.0
        %1699 = vmatpush2.xpose.msra.mxu0 0.0
        %1700 = vmatprep.subr.mxu0 0.0
        %1701 = vmatpush2.xpose.msra.mxu0 0.0
        %1702 = vmatprep.subr.mxu0 0.0
        %1703 = vmatpush2.xpose.msra.mxu0 0.0
        %1704 = vmatprep.subr.mxu0 0.0
        %1705 = vmatpush2.xpose.msra.mxu0 0.0
        %1706 = vmatprep.subr.mxu0 0.0
        %1707 = vmatpush2.xpose.msra.mxu0 0.0
        %1708 = vmatprep.subr.mxu0 0.0
        %1709 = vmatpush2.xpose.msra.mxu0 0.0
        %1710 = vmatprep.subr.mxu0 0.0
        %1711 = vmatpush2.xpose.msra.mxu0 0.0
        %1712 = vmatprep.mubr.f32.mxu0 0.0
        %1713 = vmatmul.mubr.f32.gmra.mxu0 %v1638
        %v1714 = vpop.f32.mrf.mxu0
        %v1715 = vadd.f32 0.0, %v1714
        %v1716 = vpop.f32.mrf.mxu0
        %1717 = vdwg.mxu0
        %v1718 = vadd.f32 %v1427, %v1715
        %v1719 = vld [vmem:[%s4] sm:$0x1]
        %v1721 = vlaneseq
        %v1722 = vshrl.u32 %v1721, 7
        %v1723 = vsub.s32 0, %v1722
        %v1724 = vrot.slane %v1719, %v1723
        %v1726 = vadd.f32 %v1718, %v1724
        %vm1727 = vcmask 261120
        %1728 = vst.msk [vmem:[%s499] sm:$0xff] %vm1727, %v1726
        %s1729 = sand.u32 %s163, 1
        %s1730 = scalar_lea.sflag [#allocation6], %s1729
        %s1731 = sand.u32 %s163, 1
        %s1732 = smul.addr %s1731, 8
        %s1733 = scalar_lea.vmem [#allocation5], %s1732
        // Predicated region
        $region164: #{multi_head_attn_forward.3} parent=150 // pred_check
          %p1734 = pneg %p173
        $region165: #{multi_head_attn_forward.3} parent=150 // pred_check_branch
          %1736 = sbr.rel (%p1734) target = $region167
        $region166: #{multi_head_attn_forward.3} parent=150 // pred_region
          %s1738 = ssub.s32 128, 128
          %1739 = vsyncadd %s1730, %s1738
          %s1740 = sadd.s32 %s24, %s23
          %s1741 = smul.addr %s1740, 128
          %s1742 = scalar_lea.hbm %s5, %s1741
          %s1744 = sshll.u32 %s1733, 4
          %s1745 = int_to_ptr.vmem [resolvable:$true] %s1744
          %1747 = dma.vmem_to_hbm [thread:$0]  %s1745, 128, %s1742, %s1730
        $region167: #{multi_head_attn_forward.3} parent=150 // pred_fallthru
          _
      $region151: #{multi_head_attn_forward.3} parent=5 // pred_fallthru
        _
      %p1748 = scmp.le.s32.totalorder 2, %s14
      // Predicated region
      $region168: #{multi_head_attn_forward.3} parent=5 // pred_check
        %p1749 = pneg %p1748
      $region169: #{multi_head_attn_forward.3} parent=5 // pred_check_branch
        %1751 = sbr.rel (%p1749) target = $region171
      $region170: #{multi_head_attn_forward.3} parent=5 // pred_region
        %s1752 = ssub.s32 %s14, 2
        // Predicated region
        $region172: #{multi_head_attn_forward.3} parent=170 // pred_check
          %p1753 = pneg %p179
        $region173: #{multi_head_attn_forward.3} parent=170 // pred_check_branch
          %1755 = sbr.rel (%p1753) target = $region175
        $region174: #{multi_head_attn_forward.3} parent=170 // pred_region
          %s1756 = sand.u32 %s164, 1
          %s1757 = scalar_lea.sflag [#allocation6], %s1756
          %s1758 = sand.u32 %s164, 1
          %s1759 = smul.addr %s1758, 8
          %s1760 = scalar_lea.vmem [#allocation5], %s1759
          %1761 = dma.done %s1757, 128
        $region175: #{multi_head_attn_forward.3} parent=170 // pred_fallthru
          _
      $region171: #{multi_head_attn_forward.3} parent=5 // pred_fallthru
        _
    $region6: #{multi_head_attn_forward.3} parent=1 // loop_footer
      %s18 = sadd.s32 1, %s14
    $region7: #{multi_head_attn_forward.3} parent=1 // loop_footer_branch
      %13 = sbr.rel target = $region3
    $region8: #{multi_head_attn_forward.3} parent=1 // loop_exit
      _
    %1762 = vsyncpa [#allocation6], 1
    %s1763 = scalar_lea.sflag [#allocation6], 1
    %1764 = vsyncpa %s1763, 1

</llo_original>
